<compile_context>
chip_gen: v7x
topology: tpu7x:2x2x1
jax: 0.10.0
libtpu: 0.0.40
codegen_flags: <defaults>
</compile_context>

<pallas_src>
import numpy as np
import jax
import jax.numpy as jnp
from jax.experimental import pallas as pl
from jax.experimental.pallas import tpu as pltpu

LANE = 128  # lane-dense padded width for the fused head output

DEPTH_INPUT_KEYS = ("WQ", "WK", "WV", "WU", "BU", "G1", "BE1",
                    "W1", "BF1", "W2", "BF2", "G2", "BE2")


# ----------------------------------------------------------------------------
# Fused kernel: pos-add + all `depth` blocks (in-kernel loop, resident weights)
# + max-pool + both regression heads.  Grid = (B // Bb,) over batch blocks.
# ----------------------------------------------------------------------------
def fused_forward_kernel(x_ref, pos_ref, wq_ref, wk_ref, wv_ref, wu_ref, bu_ref,
                         g1_ref, be1_ref, w1_ref, bf1_ref, w2_ref, bf2_ref,
                         g2_ref, be2_ref, wab_ref, bab_ref,
                         out_ref, xs_ref, att_ref):
    Bb, T, E = x_ref.shape
    depth = wq_ref.shape[0]
    HE = wq_ref.shape[2]           # emb * heads
    H = HE // E
    eps = 1e-5
    inv_sqrt_e = 1.0 / (float(E) ** 0.5)   # (1/e**(1/4))**2, applied once to q

    # ---- positional embedding add; activation resident as (Bb*T, E) ----
    xs_ref[...] = (x_ref[...] + pos_ref[...]).reshape(Bb * T, E)

    # ---- all transformer blocks: in-kernel loop over depth ----
    @pl.loop(0, depth)
    def _block(d):
        x = xs_ref[...]                                            # (Bb*T, E)

        # Full-width projections: M = Bb*T rows per MXU push.
        q_all = jnp.dot(x, wq_ref[d],
                        preferred_element_type=jnp.float32) * inv_sqrt_e
        k_all = jnp.dot(x, wk_ref[d], preferred_element_type=jnp.float32)
        v_all = jnp.dot(x, wv_ref[d], preferred_element_type=jnp.float32)

        # Per-head attention, batched over the Bb rows of this block.
        for h in range(H):
            lo = h * E
            qh = q_all[:, lo:lo + E].reshape(Bb, T, E)
            kh = k_all[:, lo:lo + E].reshape(Bb, T, E)
            vh = v_all[:, lo:lo + E].reshape(Bb, T, E)
            s = jnp.einsum("bte,bse->bts", qh, kh,
                           preferred_element_type=jnp.float32)
            s = s - jnp.max(s, axis=-1, keepdims=True)
            p = jnp.exp(s)
            p = p * pl.reciprocal(jnp.sum(p, axis=-1, keepdims=True),
                                  approx=True)
            oh = jnp.einsum("bts,bse->bte", p, vh,
                            preferred_element_type=jnp.float32)
            # Write head output straight into its lane slot (no concatenate).
            att_ref[:, lo:lo + E] = oh.reshape(Bb * T, E)

        # unifyheads: one (Bb*T, HE) @ (HE, E) matmul.
        att = jnp.dot(att_ref[...], wu_ref[d],
                      preferred_element_type=jnp.float32) + bu_ref[d]

        # residual + LayerNorm 1
        y = att + x
        mu = jnp.mean(y, axis=-1, keepdims=True)
        yc = y - mu
        var = jnp.mean(yc * yc, axis=-1, keepdims=True)
        y = yc * jax.lax.rsqrt(var + eps) * g1_ref[d] + be1_ref[d]

        # feed-forward: Linear -> ReLU -> Linear
        hdd = jnp.dot(y, w1_ref[d],
                      preferred_element_type=jnp.float32) + bf1_ref[d]
        hdd = jnp.maximum(hdd, 0.0)
        ff = jnp.dot(hdd, w2_ref[d],
                     preferred_element_type=jnp.float32) + bf2_ref[d]

        # residual + LayerNorm 2
        z = ff + y
        mu2 = jnp.mean(z, axis=-1, keepdims=True)
        zc = z - mu2
        var2 = jnp.mean(zc * zc, axis=-1, keepdims=True)
        z = zc * jax.lax.rsqrt(var2 + eps) * g2_ref[d] + be2_ref[d]

        xs_ref[...] = z                                            # carry

    # ---- global max-pool over T + both heads (lane-dense combined slab) ----
    xf = xs_ref[...].reshape(Bb, T, E)
    pooled = jnp.max(xf, axis=1)                                   # (Bb, E)
    heads = jnp.dot(pooled, wab_ref[...],
                    preferred_element_type=jnp.float32) + bab_ref[...]
    out_ref[...] = heads[:, None, :]                               # (Bb,1,LANE)


# ----------------------------------------------------------------------------
# Wrapper: one pallas_call for the whole forward.
# ----------------------------------------------------------------------------
def _pick_batch_block(batch, seq):
    """Batch rows per grid step: target ~128 MXU rows, keep >=2 grid blocks
    when batch >= 2 so v7x's two TensorCores both get work."""
    bb = max(1, min(batch, max(1, 128 // max(seq, 1))))
    while batch % bb:
        bb -= 1
    if batch >= 2 and batch // bb < 2:
        bb = max(1, bb // 2)
        while batch % bb:
            bb -= 1
    return bb


def rtransformer_forward(x, params, num_classes):
    """x: (B, T, E) float32 pre-embedded sentences. Returns (x_a, x_b)."""
    B, T, E = x.shape
    D, _, HE = params["WQ"].shape
    FF = params["W1"].shape[2]
    H = HE // E
    pos = params["pos"][:T]

    Bb = _pick_batch_block(B, T)
    nb = B // Bb

    def const_spec(arr):
        nd = arr.ndim
        return pl.BlockSpec(tuple(arr.shape), lambda b, _n=nd: (0,) * _n)

    in_arrays = ([pos] + [params[k] for k in DEPTH_INPUT_KEYS]
                 + [params["WAB"], params["BAB"]])
    in_specs = ([pl.BlockSpec((Bb, T, E), lambda b: (b, 0, 0))]
                + [const_spec(a) for a in in_arrays])

    # --- VMEM residency budget (v7x is the tightest: 64 MiB physical) ---
    def nbytes(a):
        return int(np.prod(a.shape)) * np.dtype(a.dtype).itemsize

    resident = sum(nbytes(a) for a in in_arrays)              # loaded once
    block_io = (Bb * T * E + Bb * LANE) * 4                   # x block + out
    scratch = Bb * T * (E + HE) * 4
    vmem_needed = 2 * (resident + block_io) + scratch         # 2x: pipelining
    # TODO(synk): if vmem_needed exceeds ~half of v7x VMEM (32 MiB), keep depth
    # as a grid axis with chunked weights instead of collapsing it in-kernel.
    vmem_limit = int(min(100 * 2**20, max(16 * 2**20, vmem_needed + (4 << 20))))

    per_bd_flops = (2 * T * E * HE * 3          # q, k, v projections
                    + 2 * H * T * T * E * 2     # scores + PV
                    + 2 * T * HE * E            # unifyheads
                    + 2 * T * E * FF + 2 * T * FF * E)   # FFN
    cost = pl.CostEstimate(
        flops=int(B * D * per_bd_flops + B * 2 * E * LANE),
        transcendentals=int(B * D * (H * T * T + H * T + 2 * T)),
        bytes_accessed=int(resident + B * T * E * 4 + B * LANE * 4),
    )

    out = pl.pallas_call(
        fused_forward_kernel,
        out_shape=jax.ShapeDtypeStruct((B, 1, LANE), jnp.float32),
        grid_spec=pltpu.PrefetchScalarGridSpec(
            num_scalar_prefetch=0,
            grid=(nb,),
            in_specs=in_specs,
            out_specs=pl.BlockSpec((Bb, 1, LANE), lambda b: (b, 0, 0)),
            scratch_shapes=[pltpu.VMEM((Bb * T, E), jnp.float32),
                            pltpu.VMEM((Bb * T, HE), jnp.float32)],
        ),
        compiler_params=pltpu.CompilerParams(
            dimension_semantics=("parallel",),
            vmem_limit_bytes=vmem_limit),
        cost_estimate=cost,
    )(x, *in_arrays)

    C = num_classes
    x_a = jnp.squeeze(out[:, 0, :C])
    x_b = jnp.squeeze(out[:, 0, C:2 * C])
    return x_a, x_b


# ----------------------------------------------------------------------------
# Deterministic synthetic params (depth-stacked for the fused kernel)
# ----------------------------------------------------------------------------
def init_params(key, emb, heads, depth, seq_length, num_classes):
    he = emb * heads
    ff = 4 * emb
    keys = jax.random.split(key, 10)

    def rnd(k, shape):
        return 0.02 * jax.random.normal(k, shape, jnp.float32)

    p = {}
    p["pos"] = rnd(keys[0], (seq_length, emb))
    p["wa"] = rnd(keys[1], (emb, num_classes))
    p["ba"] = jnp.zeros((1, num_classes), jnp.float32)
    p["wb"] = rnd(keys[2], (emb, num_classes))
    p["bb"] = jnp.zeros((1, num_classes), jnp.float32)

    p["WQ"] = rnd(keys[3], (depth, emb, he))
    p["WK"] = rnd(keys[4], (depth, emb, he))
    p["WV"] = rnd(keys[5], (depth, emb, he))
    p["WU"] = rnd(keys[6], (depth, he, emb))
    p["BU"] = 0.01 * jax.random.normal(keys[7], (depth, 1, emb), jnp.float32)
    p["G1"] = jnp.ones((depth, 1, emb), jnp.float32)
    p["BE1"] = jnp.zeros((depth, 1, emb), jnp.float32)
    p["W1"] = rnd(keys[8], (depth, emb, ff))
    p["BF1"] = jnp.zeros((depth, 1, ff), jnp.float32)
    p["W2"] = rnd(keys[9], (depth, ff, emb))
    p["BF2"] = jnp.zeros((depth, 1, emb), jnp.float32)
    p["G2"] = jnp.ones((depth, 1, emb), jnp.float32)
    p["BE2"] = jnp.zeros((depth, 1, emb), jnp.float32)

    # Lane-dense combined regression heads: columns [0:C]=wa, [C:2C]=wb, rest 0.
    C = num_classes
    wab = jnp.zeros((emb, LANE), jnp.float32)
    wab = wab.at[:, :C].set(p["wa"]).at[:, C:2 * C].set(p["wb"])
    bab = jnp.zeros((1, LANE), jnp.float32)
    bab = bab.at[:, :C].set(p["ba"]).at[:, C:2 * C].set(p["bb"])
    p["WAB"] = wab
    p["BAB"] = bab
    return p


# ----------------------------------------------------------------------------
# Pure-JAX reference (mirrors the PyTorch module math) for correctness check
# ----------------------------------------------------------------------------
def reference_forward(x, params):
    eps = 1e-5
    B, T, E = x.shape
    D = params["WQ"].shape[0]
    H = params["WQ"].shape[2] // E
    x = x + params["pos"][None, :T, :]
    for d in range(D):
        wq, wk, wv = params["WQ"][d], params["WK"][d], params["WV"][d]
        wu, bu = params["WU"][d], params["BU"][d, 0]
        g1, be1 = params["G1"][d, 0], params["BE1"][d, 0]
        w1, bf1 = params["W1"][d], params["BF1"][d, 0]
        w2, bf2 = params["W2"][d], params["BF2"][d, 0]
        g2, be2 = params["G2"][d, 0], params["BE2"][d, 0]

        scale = 1.0 / (float(E) ** 0.25)
        q = (x @ wq).reshape(B, T, H, E).transpose(0, 2, 1, 3) * scale
        k = (x @ wk).reshape(B, T, H, E).transpose(0, 2, 1, 3) * scale
        v = (x @ wv).reshape(B, T, H, E).transpose(0, 2, 1, 3)
        dot = jnp.einsum("bhte,bhse->bhts", q, k)
        dot = jax.nn.softmax(dot, axis=-1)
        out = jnp.einsum("bhts,bhse->bhte", dot, v)
        out = out.transpose(0, 2, 1, 3).reshape(B, T, H * E)
        att = out @ wu + bu

        y = att + x
        mu = y.mean(-1, keepdims=True)
        var = ((y - mu) ** 2).mean(-1, keepdims=True)
        y = (y - mu) / jnp.sqrt(var + eps) * g1 + be1

        ff = jnp.maximum(y @ w1 + bf1, 0.0) @ w2 + bf2
        z = ff + y
        mu2 = z.mean(-1, keepdims=True)
        var2 = ((z - mu2) ** 2).mean(-1, keepdims=True)
        x = (z - mu2) / jnp.sqrt(var2 + eps) * g2 + be2

    pooled = x.max(axis=1)
    return (jnp.squeeze(pooled @ params["wa"] + params["ba"][0]),
            jnp.squeeze(pooled @ params["wb"] + params["bb"][0]))


if __name__ == "__main__":
    # Small shapes consistent with the module: batch=2, seq=8, emb=32,
    # heads=4, depth=2, num_classes=1, seq_length=8, max_pool=True.
    B, T, E = 2, 8, 32
    HEADS, DEPTH, NUM_CLASSES, SEQ_LEN = 4, 2, 1, 8

    key = jax.random.PRNGKey(0)
    k_x, k_p = jax.random.split(key)
    x = jax.random.normal(k_x, (B, T, E), jnp.float32)
    params = init_params(k_p, E, HEADS, DEPTH, SEQ_LEN, NUM_CLASSES)

    x_a, x_b = rtransformer_forward(x, params, NUM_CLASSES)
    x_a = jax.block_until_ready(x_a)
    x_b = jax.block_until_ready(x_b)

    r_a, r_b = reference_forward(x, params)
    np.testing.assert_allclose(np.asarray(x_a), np.asarray(r_a), rtol=1e-3, atol=1e-3)
    np.testing.assert_allclose(np.asarray(x_b), np.asarray(r_b), rtol=1e-3, atol=1e-3)

    print("KERNEL_OK")
</pallas_src>

<mosaic_0001>
module attributes {stable_mosaic.version = 11 : i64} {
  func.func @fused_forward_kernel(%arg0: i32, %arg1: memref<1x8x32xf32, #tpu.memory_space<vmem>>, %arg2: memref<8x32xf32, #tpu.memory_space<vmem>>, %arg3: memref<2x32x128xf32, #tpu.memory_space<vmem>>, %arg4: memref<2x32x128xf32, #tpu.memory_space<vmem>>, %arg5: memref<2x32x128xf32, #tpu.memory_space<vmem>>, %arg6: memref<2x128x32xf32, #tpu.memory_space<vmem>>, %arg7: memref<2x1x32xf32, #tpu.memory_space<vmem>>, %arg8: memref<2x1x32xf32, #tpu.memory_space<vmem>>, %arg9: memref<2x1x32xf32, #tpu.memory_space<vmem>>, %arg10: memref<2x32x128xf32, #tpu.memory_space<vmem>>, %arg11: memref<2x1x128xf32, #tpu.memory_space<vmem>>, %arg12: memref<2x128x32xf32, #tpu.memory_space<vmem>>, %arg13: memref<2x1x32xf32, #tpu.memory_space<vmem>>, %arg14: memref<2x1x32xf32, #tpu.memory_space<vmem>>, %arg15: memref<2x1x32xf32, #tpu.memory_space<vmem>>, %arg16: memref<32x128xf32, #tpu.memory_space<vmem>>, %arg17: memref<1x128xf32, #tpu.memory_space<vmem>>, %arg18: memref<1x1x128xf32, #tpu.memory_space<vmem>>, %arg19: memref<8x32xf32, #tpu.memory_space<vmem>>, %arg20: memref<8x128xf32, #tpu.memory_space<vmem>>) attributes {dimension_semantics = [#tpu.dimension_semantics<parallel>], iteration_bounds = array<i64: 2>, scalar_prefetch = 0 : i64, scratch_operands = 2 : i64, tpu.core_type = #tpu.core_type<tc>, window_params = [{transform_indices = @transform_0, window_bounds = array<i64: 1, 8, 32>}, {pipeline_mode = #tpu.pipeline_mode<synchronous>, transform_indices = @transform_1, window_bounds = array<i64: 8, 32>}, {pipeline_mode = #tpu.pipeline_mode<synchronous>, transform_indices = @transform_2, window_bounds = array<i64: 2, 32, 128>}, {pipeline_mode = #tpu.pipeline_mode<synchronous>, transform_indices = @transform_3, window_bounds = array<i64: 2, 32, 128>}, {pipeline_mode = #tpu.pipeline_mode<synchronous>, transform_indices = @transform_4, window_bounds = array<i64: 2, 32, 128>}, {pipeline_mode = #tpu.pipeline_mode<synchronous>, transform_indices = @transform_5, window_bounds = array<i64: 2, 128, 32>}, {pipeline_mode = #tpu.pipeline_mode<synchronous>, transform_indices = @transform_6, window_bounds = array<i64: 2, 1, 32>}, {pipeline_mode = #tpu.pipeline_mode<synchronous>, transform_indices = @transform_7, window_bounds = array<i64: 2, 1, 32>}, {pipeline_mode = #tpu.pipeline_mode<synchronous>, transform_indices = @transform_8, window_bounds = array<i64: 2, 1, 32>}, {pipeline_mode = #tpu.pipeline_mode<synchronous>, transform_indices = @transform_9, window_bounds = array<i64: 2, 32, 128>}, {pipeline_mode = #tpu.pipeline_mode<synchronous>, transform_indices = @transform_10, window_bounds = array<i64: 2, 1, 128>}, {pipeline_mode = #tpu.pipeline_mode<synchronous>, transform_indices = @transform_11, window_bounds = array<i64: 2, 128, 32>}, {pipeline_mode = #tpu.pipeline_mode<synchronous>, transform_indices = @transform_12, window_bounds = array<i64: 2, 1, 32>}, {pipeline_mode = #tpu.pipeline_mode<synchronous>, transform_indices = @transform_13, window_bounds = array<i64: 2, 1, 32>}, {pipeline_mode = #tpu.pipeline_mode<synchronous>, transform_indices = @transform_14, window_bounds = array<i64: 2, 1, 32>}, {pipeline_mode = #tpu.pipeline_mode<synchronous>, transform_indices = @transform_15, window_bounds = array<i64: 32, 128>}, {pipeline_mode = #tpu.pipeline_mode<synchronous>, transform_indices = @transform_16, window_bounds = array<i64: 1, 128>}, {transform_indices = @transform_17, window_bounds = array<i64: 1, 1, 128>}]} {
    %c0 = arith.constant 0 : index
    %c0_0 = arith.constant 0 : index
    %c0_1 = arith.constant 0 : index
    %0 = vector.load %arg1[%c0, %c0_0, %c0_1] : memref<1x8x32xf32, #tpu.memory_space<vmem>>, vector<1x8x32xf32>
    %c0_2 = arith.constant 0 : index
    %c0_3 = arith.constant 0 : index
    %1 = vector.load %arg2[%c0_2, %c0_3] : memref<8x32xf32, #tpu.memory_space<vmem>>, vector<8x32xf32>
    %2 = vector.shape_cast %1 : vector<8x32xf32> to vector<1x8x32xf32>
    %3 = arith.addf %0, %2 : vector<1x8x32xf32>
    %4 = vector.shape_cast %3 : vector<1x8x32xf32> to vector<8x32xf32>
    %c0_4 = arith.constant 0 : index
    %c0_5 = arith.constant 0 : index
    %5 = vector.load %arg19[%c0_4, %c0_5] : memref<8x32xf32, #tpu.memory_space<vmem>>, vector<8x32xf32>
    tpu.vector_store %arg19[%c0_4, %c0_5], %4 {strides = array<i32>} : memref<8x32xf32, #tpu.memory_space<vmem>>, vector<8x32xf32>,
    %c0_i32 = arith.constant 0 : i32
    %c2_i32 = arith.constant 2 : i32
    %6 = arith.addi %c0_i32, %c2_i32 : i32
    %c1_i32 = arith.constant 1 : i32
    scf.for %arg21 = %c0_i32 to %6 step %c1_i32  : i32 {
      %c1_i32_17 = arith.constant 1 : i32
      %16 = arith.muli %arg21, %c1_i32_17 : i32
      %c0_i32_18 = arith.constant 0 : i32
      %17 = arith.addi %c0_i32_18, %16 : i32
      %c0_19 = arith.constant 0 : index
      %c0_20 = arith.constant 0 : index
      %18 = vector.load %arg19[%c0_19, %c0_20] : memref<8x32xf32, #tpu.memory_space<vmem>>, vector<8x32xf32>
      %19 = arith.index_cast %17 : i32 to index
      %c0_21 = arith.constant 0 : index
      %c0_22 = arith.constant 0 : index
      %20 = vector.load %arg3[%19, %c0_21, %c0_22] : memref<2x32x128xf32, #tpu.memory_space<vmem>>, vector<1x32x128xf32>
      %21 = vector.shape_cast %20 : vector<1x32x128xf32> to vector<32x128xf32>
      %cst_23 = arith.constant dense<0.000000e+00> : vector<8x128xf32>
      %22 = tpu.matmul %18, %21, %cst_23 {dimension_numbers = #tpu.dot_dimension_numbers<[1], [0], [0], [1], [0, 0, 1, 1], [], []>} : vector<8x32xf32>, vector<32x128xf32>, vector<8x128xf32> -> vector<8x128xf32>
      %cst_24 = arith.constant 0.176776692 : f32
      %23 = vector.broadcast %cst_24 : f32 to vector<8x128xf32>
      %24 = arith.mulf %22, %23 : vector<8x128xf32>
      %25 = arith.index_cast %17 : i32 to index
      %c0_25 = arith.constant 0 : index
      %c0_26 = arith.constant 0 : index
      %26 = vector.load %arg4[%25, %c0_25, %c0_26] : memref<2x32x128xf32, #tpu.memory_space<vmem>>, vector<1x32x128xf32>
      %27 = vector.shape_cast %26 : vector<1x32x128xf32> to vector<32x128xf32>
      %cst_27 = arith.constant dense<0.000000e+00> : vector<8x128xf32>
      %28 = tpu.matmul %18, %27, %cst_27 {dimension_numbers = #tpu.dot_dimension_numbers<[1], [0], [0], [1], [0, 0, 1, 1], [], []>} : vector<8x32xf32>, vector<32x128xf32>, vector<8x128xf32> -> vector<8x128xf32>
      %29 = arith.index_cast %17 : i32 to index
      %c0_28 = arith.constant 0 : index
      %c0_29 = arith.constant 0 : index
      %30 = vector.load %arg5[%29, %c0_28, %c0_29] : memref<2x32x128xf32, #tpu.memory_space<vmem>>, vector<1x32x128xf32>
      %31 = vector.shape_cast %30 : vector<1x32x128xf32> to vector<32x128xf32>
      %cst_30 = arith.constant dense<0.000000e+00> : vector<8x128xf32>
      %32 = tpu.matmul %18, %31, %cst_30 {dimension_numbers = #tpu.dot_dimension_numbers<[1], [0], [0], [1], [0, 0, 1, 1], [], []>} : vector<8x32xf32>, vector<32x128xf32>, vector<8x128xf32> -> vector<8x128xf32>
      %33 = vector.extract_strided_slice %24 {offsets = [0, 0], sizes = [8, 32], strides = [1, 1]} : vector<8x128xf32> to vector<8x32xf32>
      %34 = vector.shape_cast %33 : vector<8x32xf32> to vector<1x8x32xf32>
      %35 = vector.extract_strided_slice %28 {offsets = [0, 0], sizes = [8, 32], strides = [1, 1]} : vector<8x128xf32> to vector<8x32xf32>
      %36 = vector.shape_cast %35 : vector<8x32xf32> to vector<1x8x32xf32>
      %37 = vector.extract_strided_slice %32 {offsets = [0, 0], sizes = [8, 32], strides = [1, 1]} : vector<8x128xf32> to vector<8x32xf32>
      %38 = vector.shape_cast %37 : vector<8x32xf32> to vector<1x8x32xf32>
      "tpu.trace_start"() <{level = 10 : i32, message = "bte,bse->bts"}> : () -> ()
      %cst_31 = arith.constant dense<0.000000e+00> : vector<1x8x8xf32>
      %39 = tpu.matmul %34, %36, %cst_31 {dimension_numbers = #tpu.dot_dimension_numbers<[2], [2], [1], [1], [0, 0, 0, 1, 1, 1], [0], [0]>} : vector<1x8x32xf32>, vector<1x8x32xf32>, vector<1x8x8xf32> -> vector<1x8x8xf32>
      "tpu.trace_stop"() : () -> ()
      %cst_32 = arith.constant dense<0xFF800000> : vector<1x8xf32>
      %40 = vector.multi_reduction <maximumf>, %39, %cst_32 [2] : vector<1x8x8xf32> to vector<1x8xf32>
      %41 = vector.shape_cast %40 : vector<1x8xf32> to vector<1x8x1xf32>
      %42 = vector.broadcast %41 : vector<1x8x1xf32> to vector<1x8x8xf32>
      %43 = arith.subf %39, %42 : vector<1x8x8xf32>
      %44 = math.exp %43 : vector<1x8x8xf32>
      %cst_33 = arith.constant dense<0.000000e+00> : vector<1x8xf32>
      %45 = vector.multi_reduction <add>, %44, %cst_33 [2] : vector<1x8x8xf32> to vector<1x8xf32>
      %46 = vector.shape_cast %45 : vector<1x8xf32> to vector<1x8x1xf32>
      %47 = tpu.reciprocal %46 {approx = true} : vector<1x8x1xf32> -> vector<1x8x1xf32>
      %48 = vector.broadcast %47 : vector<1x8x1xf32> to vector<1x8x8xf32>
      %49 = arith.mulf %44, %48 : vector<1x8x8xf32>
      "tpu.trace_start"() <{level = 10 : i32, message = "bts,bse->bte"}> : () -> ()
      %cst_34 = arith.constant dense<0.000000e+00> : vector<1x8x32xf32>
      %50 = tpu.matmul %49, %38, %cst_34 {dimension_numbers = #tpu.dot_dimension_numbers<[2], [1], [1], [2], [0, 0, 0, 1, 1, 2], [0], [0]>} : vector<1x8x8xf32>, vector<1x8x32xf32>, vector<1x8x32xf32> -> vector<1x8x32xf32>
      "tpu.trace_stop"() : () -> ()
      %51 = vector.shape_cast %50 : vector<1x8x32xf32> to vector<8x32xf32>
      %c0_35 = arith.constant 0 : index
      %c0_36 = arith.constant 0 : index
      %52 = vector.load %arg20[%c0_35, %c0_36] : memref<8x128xf32, #tpu.memory_space<vmem>>, vector<8x32xf32>
      tpu.vector_store %arg20[%c0_35, %c0_36], %51 {strides = array<i32>} : memref<8x128xf32, #tpu.memory_space<vmem>>, vector<8x32xf32>,
      %53 = vector.extract_strided_slice %24 {offsets = [0, 32], sizes = [8, 32], strides = [1, 1]} : vector<8x128xf32> to vector<8x32xf32>
      %54 = vector.shape_cast %53 : vector<8x32xf32> to vector<1x8x32xf32>
      %55 = vector.extract_strided_slice %28 {offsets = [0, 32], sizes = [8, 32], strides = [1, 1]} : vector<8x128xf32> to vector<8x32xf32>
      %56 = vector.shape_cast %55 : vector<8x32xf32> to vector<1x8x32xf32>
      %57 = vector.extract_strided_slice %32 {offsets = [0, 32], sizes = [8, 32], strides = [1, 1]} : vector<8x128xf32> to vector<8x32xf32>
      %58 = vector.shape_cast %57 : vector<8x32xf32> to vector<1x8x32xf32>
      "tpu.trace_start"() <{level = 10 : i32, message = "bte,bse->bts"}> : () -> ()
      %cst_37 = arith.constant dense<0.000000e+00> : vector<1x8x8xf32>
      %59 = tpu.matmul %54, %56, %cst_37 {dimension_numbers = #tpu.dot_dimension_numbers<[2], [2], [1], [1], [0, 0, 0, 1, 1, 1], [0], [0]>} : vector<1x8x32xf32>, vector<1x8x32xf32>, vector<1x8x8xf32> -> vector<1x8x8xf32>
      "tpu.trace_stop"() : () -> ()
      %cst_38 = arith.constant dense<0xFF800000> : vector<1x8xf32>
      %60 = vector.multi_reduction <maximumf>, %59, %cst_38 [2] : vector<1x8x8xf32> to vector<1x8xf32>
      %61 = vector.shape_cast %60 : vector<1x8xf32> to vector<1x8x1xf32>
      %62 = vector.broadcast %61 : vector<1x8x1xf32> to vector<1x8x8xf32>
      %63 = arith.subf %59, %62 : vector<1x8x8xf32>
      %64 = math.exp %63 : vector<1x8x8xf32>
      %cst_39 = arith.constant dense<0.000000e+00> : vector<1x8xf32>
      %65 = vector.multi_reduction <add>, %64, %cst_39 [2] : vector<1x8x8xf32> to vector<1x8xf32>
      %66 = vector.shape_cast %65 : vector<1x8xf32> to vector<1x8x1xf32>
      %67 = tpu.reciprocal %66 {approx = true} : vector<1x8x1xf32> -> vector<1x8x1xf32>
      %68 = vector.broadcast %67 : vector<1x8x1xf32> to vector<1x8x8xf32>
      %69 = arith.mulf %64, %68 : vector<1x8x8xf32>
      "tpu.trace_start"() <{level = 10 : i32, message = "bts,bse->bte"}> : () -> ()
      %cst_40 = arith.constant dense<0.000000e+00> : vector<1x8x32xf32>
      %70 = tpu.matmul %69, %58, %cst_40 {dimension_numbers = #tpu.dot_dimension_numbers<[2], [1], [1], [2], [0, 0, 0, 1, 1, 2], [0], [0]>} : vector<1x8x8xf32>, vector<1x8x32xf32>, vector<1x8x32xf32> -> vector<1x8x32xf32>
      "tpu.trace_stop"() : () -> ()
      %71 = vector.shape_cast %70 : vector<1x8x32xf32> to vector<8x32xf32>
      %c0_41 = arith.constant 0 : index
      %c32 = arith.constant 32 : index
      %72 = vector.load %arg20[%c0_41, %c32] : memref<8x128xf32, #tpu.memory_space<vmem>>, vector<8x32xf32>
      tpu.vector_store %arg20[%c0_41, %c32], %71 {strides = array<i32>} : memref<8x128xf32, #tpu.memory_space<vmem>>, vector<8x32xf32>,
      %73 = vector.extract_strided_slice %24 {offsets = [0, 64], sizes = [8, 32], strides = [1, 1]} : vector<8x128xf32> to vector<8x32xf32>
      %74 = vector.shape_cast %73 : vector<8x32xf32> to vector<1x8x32xf32>
      %75 = vector.extract_strided_slice %28 {offsets = [0, 64], sizes = [8, 32], strides = [1, 1]} : vector<8x128xf32> to vector<8x32xf32>
      %76 = vector.shape_cast %75 : vector<8x32xf32> to vector<1x8x32xf32>
      %77 = vector.extract_strided_slice %32 {offsets = [0, 64], sizes = [8, 32], strides = [1, 1]} : vector<8x128xf32> to vector<8x32xf32>
      %78 = vector.shape_cast %77 : vector<8x32xf32> to vector<1x8x32xf32>
      "tpu.trace_start"() <{level = 10 : i32, message = "bte,bse->bts"}> : () -> ()
      %cst_42 = arith.constant dense<0.000000e+00> : vector<1x8x8xf32>
      %79 = tpu.matmul %74, %76, %cst_42 {dimension_numbers = #tpu.dot_dimension_numbers<[2], [2], [1], [1], [0, 0, 0, 1, 1, 1], [0], [0]>} : vector<1x8x32xf32>, vector<1x8x32xf32>, vector<1x8x8xf32> -> vector<1x8x8xf32>
      "tpu.trace_stop"() : () -> ()
      %cst_43 = arith.constant dense<0xFF800000> : vector<1x8xf32>
      %80 = vector.multi_reduction <maximumf>, %79, %cst_43 [2] : vector<1x8x8xf32> to vector<1x8xf32>
      %81 = vector.shape_cast %80 : vector<1x8xf32> to vector<1x8x1xf32>
      %82 = vector.broadcast %81 : vector<1x8x1xf32> to vector<1x8x8xf32>
      %83 = arith.subf %79, %82 : vector<1x8x8xf32>
      %84 = math.exp %83 : vector<1x8x8xf32>
      %cst_44 = arith.constant dense<0.000000e+00> : vector<1x8xf32>
      %85 = vector.multi_reduction <add>, %84, %cst_44 [2] : vector<1x8x8xf32> to vector<1x8xf32>
      %86 = vector.shape_cast %85 : vector<1x8xf32> to vector<1x8x1xf32>
      %87 = tpu.reciprocal %86 {approx = true} : vector<1x8x1xf32> -> vector<1x8x1xf32>
      %88 = vector.broadcast %87 : vector<1x8x1xf32> to vector<1x8x8xf32>
      %89 = arith.mulf %84, %88 : vector<1x8x8xf32>
      "tpu.trace_start"() <{level = 10 : i32, message = "bts,bse->bte"}> : () -> ()
      %cst_45 = arith.constant dense<0.000000e+00> : vector<1x8x32xf32>
      %90 = tpu.matmul %89, %78, %cst_45 {dimension_numbers = #tpu.dot_dimension_numbers<[2], [1], [1], [2], [0, 0, 0, 1, 1, 2], [0], [0]>} : vector<1x8x8xf32>, vector<1x8x32xf32>, vector<1x8x32xf32> -> vector<1x8x32xf32>
      "tpu.trace_stop"() : () -> ()
      %91 = vector.shape_cast %90 : vector<1x8x32xf32> to vector<8x32xf32>
      %c0_46 = arith.constant 0 : index
      %c64 = arith.constant 64 : index
      %92 = vector.load %arg20[%c0_46, %c64] : memref<8x128xf32, #tpu.memory_space<vmem>>, vector<8x32xf32>
      tpu.vector_store %arg20[%c0_46, %c64], %91 {strides = array<i32>} : memref<8x128xf32, #tpu.memory_space<vmem>>, vector<8x32xf32>,
      %93 = vector.extract_strided_slice %24 {offsets = [0, 96], sizes = [8, 32], strides = [1, 1]} : vector<8x128xf32> to vector<8x32xf32>
      %94 = vector.shape_cast %93 : vector<8x32xf32> to vector<1x8x32xf32>
      %95 = vector.extract_strided_slice %28 {offsets = [0, 96], sizes = [8, 32], strides = [1, 1]} : vector<8x128xf32> to vector<8x32xf32>
      %96 = vector.shape_cast %95 : vector<8x32xf32> to vector<1x8x32xf32>
      %97 = vector.extract_strided_slice %32 {offsets = [0, 96], sizes = [8, 32], strides = [1, 1]} : vector<8x128xf32> to vector<8x32xf32>
      %98 = vector.shape_cast %97 : vector<8x32xf32> to vector<1x8x32xf32>
      "tpu.trace_start"() <{level = 10 : i32, message = "bte,bse->bts"}> : () -> ()
      %cst_47 = arith.constant dense<0.000000e+00> : vector<1x8x8xf32>
      %99 = tpu.matmul %94, %96, %cst_47 {dimension_numbers = #tpu.dot_dimension_numbers<[2], [2], [1], [1], [0, 0, 0, 1, 1, 1], [0], [0]>} : vector<1x8x32xf32>, vector<1x8x32xf32>, vector<1x8x8xf32> -> vector<1x8x8xf32>
      "tpu.trace_stop"() : () -> ()
      %cst_48 = arith.constant dense<0xFF800000> : vector<1x8xf32>
      %100 = vector.multi_reduction <maximumf>, %99, %cst_48 [2] : vector<1x8x8xf32> to vector<1x8xf32>
      %101 = vector.shape_cast %100 : vector<1x8xf32> to vector<1x8x1xf32>
      %102 = vector.broadcast %101 : vector<1x8x1xf32> to vector<1x8x8xf32>
      %103 = arith.subf %99, %102 : vector<1x8x8xf32>
      %104 = math.exp %103 : vector<1x8x8xf32>
      %cst_49 = arith.constant dense<0.000000e+00> : vector<1x8xf32>
      %105 = vector.multi_reduction <add>, %104, %cst_49 [2] : vector<1x8x8xf32> to vector<1x8xf32>
      %106 = vector.shape_cast %105 : vector<1x8xf32> to vector<1x8x1xf32>
      %107 = tpu.reciprocal %106 {approx = true} : vector<1x8x1xf32> -> vector<1x8x1xf32>
      %108 = vector.broadcast %107 : vector<1x8x1xf32> to vector<1x8x8xf32>
      %109 = arith.mulf %104, %108 : vector<1x8x8xf32>
      "tpu.trace_start"() <{level = 10 : i32, message = "bts,bse->bte"}> : () -> ()
      %cst_50 = arith.constant dense<0.000000e+00> : vector<1x8x32xf32>
      %110 = tpu.matmul %109, %98, %cst_50 {dimension_numbers = #tpu.dot_dimension_numbers<[2], [1], [1], [2], [0, 0, 0, 1, 1, 2], [0], [0]>} : vector<1x8x8xf32>, vector<1x8x32xf32>, vector<1x8x32xf32> -> vector<1x8x32xf32>
      "tpu.trace_stop"() : () -> ()
      %111 = vector.shape_cast %110 : vector<1x8x32xf32> to vector<8x32xf32>
      %c0_51 = arith.constant 0 : index
      %c96 = arith.constant 96 : index
      %112 = vector.load %arg20[%c0_51, %c96] : memref<8x128xf32, #tpu.memory_space<vmem>>, vector<8x32xf32>
      tpu.vector_store %arg20[%c0_51, %c96], %111 {strides = array<i32>} : memref<8x128xf32, #tpu.memory_space<vmem>>, vector<8x32xf32>,
      %c0_52 = arith.constant 0 : index
      %c0_53 = arith.constant 0 : index
      %113 = vector.load %arg20[%c0_52, %c0_53] : memref<8x128xf32, #tpu.memory_space<vmem>>, vector<8x128xf32>
      %114 = arith.index_cast %17 : i32 to index
      %c0_54 = arith.constant 0 : index
      %c0_55 = arith.constant 0 : index
      %115 = vector.load %arg6[%114, %c0_54, %c0_55] : memref<2x128x32xf32, #tpu.memory_space<vmem>>, vector<1x128x32xf32>
      %116 = vector.shape_cast %115 : vector<1x128x32xf32> to vector<128x32xf32>
      %cst_56 = arith.constant dense<0.000000e+00> : vector<8x32xf32>
      %117 = tpu.matmul %113, %116, %cst_56 {dimension_numbers = #tpu.dot_dimension_numbers<[1], [0], [0], [1], [0, 0, 1, 1], [], []>} : vector<8x128xf32>, vector<128x32xf32>, vector<8x32xf32> -> vector<8x32xf32>
      %118 = arith.index_cast %17 : i32 to index
      %c0_57 = arith.constant 0 : index
      %c0_58 = arith.constant 0 : index
      %119 = vector.load %arg7[%118, %c0_57, %c0_58] : memref<2x1x32xf32, #tpu.memory_space<vmem>>, vector<1x1x32xf32>
      %120 = vector.shape_cast %119 : vector<1x1x32xf32> to vector<1x32xf32>
      %121 = vector.broadcast %120 : vector<1x32xf32> to vector<8x32xf32>
      %122 = arith.addf %117, %121 : vector<8x32xf32>
      %123 = arith.addf %122, %18 : vector<8x32xf32>
      %cst_59 = arith.constant dense<0.000000e+00> : vector<8xf32>
      %124 = vector.multi_reduction <add>, %123, %cst_59 [1] : vector<8x32xf32> to vector<8xf32>
      %125 = vector.shape_cast %124 : vector<8xf32> to vector<8x1xf32>
      %cst_60 = arith.constant 3.200000e+01 : f32
      %126 = vector.broadcast %cst_60 : f32 to vector<8x1xf32>
      %127 = arith.divf %125, %126 : vector<8x1xf32>
      %128 = vector.broadcast %127 : vector<8x1xf32> to vector<8x32xf32>
      %129 = arith.subf %123, %128 : vector<8x32xf32>
      %130 = arith.mulf %129, %129 : vector<8x32xf32>
      %cst_61 = arith.constant dense<0.000000e+00> : vector<8xf32>
      %131 = vector.multi_reduction <add>, %130, %cst_61 [1] : vector<8x32xf32> to vector<8xf32>
      %132 = vector.shape_cast %131 : vector<8xf32> to vector<8x1xf32>
      %cst_62 = arith.constant 3.200000e+01 : f32
      %133 = vector.broadcast %cst_62 : f32 to vector<8x1xf32>
      %134 = arith.divf %132, %133 : vector<8x1xf32>
      %cst_63 = arith.constant 9.99999974E-6 : f32
      %135 = vector.broadcast %cst_63 : f32 to vector<8x1xf32>
      %136 = arith.addf %134, %135 : vector<8x1xf32>
      %137 = math.rsqrt %136 : vector<8x1xf32>
      %138 = vector.broadcast %137 : vector<8x1xf32> to vector<8x32xf32>
      %139 = arith.mulf %129, %138 : vector<8x32xf32>
      %140 = arith.index_cast %17 : i32 to index
      %c0_64 = arith.constant 0 : index
      %c0_65 = arith.constant 0 : index
      %141 = vector.load %arg8[%140, %c0_64, %c0_65] : memref<2x1x32xf32, #tpu.memory_space<vmem>>, vector<1x1x32xf32>
      %142 = vector.shape_cast %141 : vector<1x1x32xf32> to vector<1x32xf32>
      %143 = vector.broadcast %142 : vector<1x32xf32> to vector<8x32xf32>
      %144 = arith.mulf %139, %143 : vector<8x32xf32>
      %145 = arith.index_cast %17 : i32 to index
      %c0_66 = arith.constant 0 : index
      %c0_67 = arith.constant 0 : index
      %146 = vector.load %arg9[%145, %c0_66, %c0_67] : memref<2x1x32xf32, #tpu.memory_space<vmem>>, vector<1x1x32xf32>
      %147 = vector.shape_cast %146 : vector<1x1x32xf32> to vector<1x32xf32>
      %148 = vector.broadcast %147 : vector<1x32xf32> to vector<8x32xf32>
      %149 = arith.addf %144, %148 : vector<8x32xf32>
      %150 = arith.index_cast %17 : i32 to index
      %c0_68 = arith.constant 0 : index
      %c0_69 = arith.constant 0 : index
      %151 = vector.load %arg10[%150, %c0_68, %c0_69] : memref<2x32x128xf32, #tpu.memory_space<vmem>>, vector<1x32x128xf32>
      %152 = vector.shape_cast %151 : vector<1x32x128xf32> to vector<32x128xf32>
      %cst_70 = arith.constant dense<0.000000e+00> : vector<8x128xf32>
      %153 = tpu.matmul %149, %152, %cst_70 {dimension_numbers = #tpu.dot_dimension_numbers<[1], [0], [0], [1], [0, 0, 1, 1], [], []>} : vector<8x32xf32>, vector<32x128xf32>, vector<8x128xf32> -> vector<8x128xf32>
      %154 = arith.index_cast %17 : i32 to index
      %c0_71 = arith.constant 0 : index
      %c0_72 = arith.constant 0 : index
      %155 = vector.load %arg11[%154, %c0_71, %c0_72] : memref<2x1x128xf32, #tpu.memory_space<vmem>>, vector<1x1x128xf32>
      %156 = vector.shape_cast %155 : vector<1x1x128xf32> to vector<1x128xf32>
      %157 = vector.broadcast %156 : vector<1x128xf32> to vector<8x128xf32>
      %158 = arith.addf %153, %157 : vector<8x128xf32>
      %cst_73 = arith.constant 0.000000e+00 : f32
      %159 = vector.broadcast %cst_73 : f32 to vector<8x128xf32>
      %160 = arith.maximumf %158, %159 : vector<8x128xf32>
      %161 = arith.index_cast %17 : i32 to index
      %c0_74 = arith.constant 0 : index
      %c0_75 = arith.constant 0 : index
      %162 = vector.load %arg12[%161, %c0_74, %c0_75] : memref<2x128x32xf32, #tpu.memory_space<vmem>>, vector<1x128x32xf32>
      %163 = vector.shape_cast %162 : vector<1x128x32xf32> to vector<128x32xf32>
      %cst_76 = arith.constant dense<0.000000e+00> : vector<8x32xf32>
      %164 = tpu.matmul %160, %163, %cst_76 {dimension_numbers = #tpu.dot_dimension_numbers<[1], [0], [0], [1], [0, 0, 1, 1], [], []>} : vector<8x128xf32>, vector<128x32xf32>, vector<8x32xf32> -> vector<8x32xf32>
      %165 = arith.index_cast %17 : i32 to index
      %c0_77 = arith.constant 0 : index
      %c0_78 = arith.constant 0 : index
      %166 = vector.load %arg13[%165, %c0_77, %c0_78] : memref<2x1x32xf32, #tpu.memory_space<vmem>>, vector<1x1x32xf32>
      %167 = vector.shape_cast %166 : vector<1x1x32xf32> to vector<1x32xf32>
      %168 = vector.broadcast %167 : vector<1x32xf32> to vector<8x32xf32>
      %169 = arith.addf %164, %168 : vector<8x32xf32>
      %170 = arith.addf %169, %149 : vector<8x32xf32>
      %cst_79 = arith.constant dense<0.000000e+00> : vector<8xf32>
      %171 = vector.multi_reduction <add>, %170, %cst_79 [1] : vector<8x32xf32> to vector<8xf32>
      %172 = vector.shape_cast %171 : vector<8xf32> to vector<8x1xf32>
      %cst_80 = arith.constant 3.200000e+01 : f32
      %173 = vector.broadcast %cst_80 : f32 to vector<8x1xf32>
      %174 = arith.divf %172, %173 : vector<8x1xf32>
      %175 = vector.broadcast %174 : vector<8x1xf32> to vector<8x32xf32>
      %176 = arith.subf %170, %175 : vector<8x32xf32>
      %177 = arith.mulf %176, %176 : vector<8x32xf32>
      %cst_81 = arith.constant dense<0.000000e+00> : vector<8xf32>
      %178 = vector.multi_reduction <add>, %177, %cst_81 [1] : vector<8x32xf32> to vector<8xf32>
      %179 = vector.shape_cast %178 : vector<8xf32> to vector<8x1xf32>
      %cst_82 = arith.constant 3.200000e+01 : f32
      %180 = vector.broadcast %cst_82 : f32 to vector<8x1xf32>
      %181 = arith.divf %179, %180 : vector<8x1xf32>
      %cst_83 = arith.constant 9.99999974E-6 : f32
      %182 = vector.broadcast %cst_83 : f32 to vector<8x1xf32>
      %183 = arith.addf %181, %182 : vector<8x1xf32>
      %184 = math.rsqrt %183 : vector<8x1xf32>
      %185 = vector.broadcast %184 : vector<8x1xf32> to vector<8x32xf32>
      %186 = arith.mulf %176, %185 : vector<8x32xf32>
      %187 = arith.index_cast %17 : i32 to index
      %c0_84 = arith.constant 0 : index
      %c0_85 = arith.constant 0 : index
      %188 = vector.load %arg14[%187, %c0_84, %c0_85] : memref<2x1x32xf32, #tpu.memory_space<vmem>>, vector<1x1x32xf32>
      %189 = vector.shape_cast %188 : vector<1x1x32xf32> to vector<1x32xf32>
      %190 = vector.broadcast %189 : vector<1x32xf32> to vector<8x32xf32>
      %191 = arith.mulf %186, %190 : vector<8x32xf32>
      %192 = arith.index_cast %17 : i32 to index
      %c0_86 = arith.constant 0 : index
      %c0_87 = arith.constant 0 : index
      %193 = vector.load %arg15[%192, %c0_86, %c0_87] : memref<2x1x32xf32, #tpu.memory_space<vmem>>, vector<1x1x32xf32>
      %194 = vector.shape_cast %193 : vector<1x1x32xf32> to vector<1x32xf32>
      %195 = vector.broadcast %194 : vector<1x32xf32> to vector<8x32xf32>
      %196 = arith.addf %191, %195 : vector<8x32xf32>
      %c0_88 = arith.constant 0 : index
      %c0_89 = arith.constant 0 : index
      %197 = vector.load %arg19[%c0_88, %c0_89] : memref<8x32xf32, #tpu.memory_space<vmem>>, vector<8x32xf32>
      tpu.vector_store %arg19[%c0_88, %c0_89], %196 {strides = array<i32>} : memref<8x32xf32, #tpu.memory_space<vmem>>, vector<8x32xf32>,
    }
    %c2_i32_6 = arith.constant 2 : i32
    %c0_7 = arith.constant 0 : index
    %c0_8 = arith.constant 0 : index
    %7 = vector.load %arg19[%c0_7, %c0_8] : memref<8x32xf32, #tpu.memory_space<vmem>>, vector<8x32xf32>
    %8 = vector.shape_cast %7 : vector<8x32xf32> to vector<1x8x32xf32>
    %cst = arith.constant dense<0xFF800000> : vector<1x32xf32>
    %9 = vector.multi_reduction <maximumf>, %8, %cst [1] : vector<1x8x32xf32> to vector<1x32xf32>
    %c0_9 = arith.constant 0 : index
    %c0_10 = arith.constant 0 : index
    %10 = vector.load %arg16[%c0_9, %c0_10] : memref<32x128xf32, #tpu.memory_space<vmem>>, vector<32x128xf32>
    %cst_11 = arith.constant dense<0.000000e+00> : vector<1x128xf32>
    %11 = tpu.matmul %9, %10, %cst_11 {dimension_numbers = #tpu.dot_dimension_numbers<[1], [0], [0], [1], [0, 0, 1, 1], [], []>} : vector<1x32xf32>, vector<32x128xf32>, vector<1x128xf32> -> vector<1x128xf32>
    %c0_12 = arith.constant 0 : index
    %c0_13 = arith.constant 0 : index
    %12 = vector.load %arg17[%c0_12, %c0_13] : memref<1x128xf32, #tpu.memory_space<vmem>>, vector<1x128xf32>
    %13 = arith.addf %11, %12 : vector<1x128xf32>
    %14 = vector.shape_cast %13 : vector<1x128xf32> to vector<1x1x128xf32>
    %c0_14 = arith.constant 0 : index
    %c0_15 = arith.constant 0 : index
    %c0_16 = arith.constant 0 : index
    %15 = vector.load %arg18[%c0_14, %c0_15, %c0_16] : memref<1x1x128xf32, #tpu.memory_space<vmem>>, vector<1x1x128xf32>
    tpu.vector_store %arg18[%c0_14, %c0_15, %c0_16], %14 {strides = array<i32>} : memref<1x1x128xf32, #tpu.memory_space<vmem>>, vector<1x1x128xf32>,
    return
  }
  func.func @transform_0(%arg0: i32) -> (i32, i32, i32) {
    %c0_i32 = arith.constant 0 : i32
    %c0_i32_0 = arith.constant 0 : i32
    %c0_i32_1 = arith.constant 0 : i32
    return %arg0, %c0_i32, %c0_i32_0 : i32, i32, i32
  }
  func.func @transform_1(%arg0: i32) -> (i32, i32) {
    %c0_i32 = arith.constant 0 : i32
    %c0_i32_0 = arith.constant 0 : i32
    %c0_i32_1 = arith.constant 0 : i32
    return %c0_i32, %c0_i32_0 : i32, i32
  }
  func.func @transform_2(%arg0: i32) -> (i32, i32, i32) {
    %c0_i32 = arith.constant 0 : i32
    %c0_i32_0 = arith.constant 0 : i32
    %c0_i32_1 = arith.constant 0 : i32
    %c0_i32_2 = arith.constant 0 : i32
    return %c0_i32, %c0_i32_0, %c0_i32_1 : i32, i32, i32
  }
  func.func @transform_3(%arg0: i32) -> (i32, i32, i32) {
    %c0_i32 = arith.constant 0 : i32
    %c0_i32_0 = arith.constant 0 : i32
    %c0_i32_1 = arith.constant 0 : i32
    %c0_i32_2 = arith.constant 0 : i32
    return %c0_i32, %c0_i32_0, %c0_i32_1 : i32, i32, i32
  }
  func.func @transform_4(%arg0: i32) -> (i32, i32, i32) {
    %c0_i32 = arith.constant 0 : i32
    %c0_i32_0 = arith.constant 0 : i32
    %c0_i32_1 = arith.constant 0 : i32
    %c0_i32_2 = arith.constant 0 : i32
    return %c0_i32, %c0_i32_0, %c0_i32_1 : i32, i32, i32
  }
  func.func @transform_5(%arg0: i32) -> (i32, i32, i32) {
    %c0_i32 = arith.constant 0 : i32
    %c0_i32_0 = arith.constant 0 : i32
    %c0_i32_1 = arith.constant 0 : i32
    %c0_i32_2 = arith.constant 0 : i32
    return %c0_i32, %c0_i32_0, %c0_i32_1 : i32, i32, i32
  }
  func.func @transform_6(%arg0: i32) -> (i32, i32, i32) {
    %c0_i32 = arith.constant 0 : i32
    %c0_i32_0 = arith.constant 0 : i32
    %c0_i32_1 = arith.constant 0 : i32
    %c0_i32_2 = arith.constant 0 : i32
    return %c0_i32, %c0_i32_0, %c0_i32_1 : i32, i32, i32
  }
  func.func @transform_7(%arg0: i32) -> (i32, i32, i32) {
    %c0_i32 = arith.constant 0 : i32
    %c0_i32_0 = arith.constant 0 : i32
    %c0_i32_1 = arith.constant 0 : i32
    %c0_i32_2 = arith.constant 0 : i32
    return %c0_i32, %c0_i32_0, %c0_i32_1 : i32, i32, i32
  }
  func.func @transform_8(%arg0: i32) -> (i32, i32, i32) {
    %c0_i32 = arith.constant 0 : i32
    %c0_i32_0 = arith.constant 0 : i32
    %c0_i32_1 = arith.constant 0 : i32
    %c0_i32_2 = arith.constant 0 : i32
    return %c0_i32, %c0_i32_0, %c0_i32_1 : i32, i32, i32
  }
  func.func @transform_9(%arg0: i32) -> (i32, i32, i32) {
    %c0_i32 = arith.constant 0 : i32
    %c0_i32_0 = arith.constant 0 : i32
    %c0_i32_1 = arith.constant 0 : i32
    %c0_i32_2 = arith.constant 0 : i32
    return %c0_i32, %c0_i32_0, %c0_i32_1 : i32, i32, i32
  }
  func.func @transform_10(%arg0: i32) -> (i32, i32, i32) {
    %c0_i32 = arith.constant 0 : i32
    %c0_i32_0 = arith.constant 0 : i32
    %c0_i32_1 = arith.constant 0 : i32
    %c0_i32_2 = arith.constant 0 : i32
    return %c0_i32, %c0_i32_0, %c0_i32_1 : i32, i32, i32
  }
  func.func @transform_11(%arg0: i32) -> (i32, i32, i32) {
    %c0_i32 = arith.constant 0 : i32
    %c0_i32_0 = arith.constant 0 : i32
    %c0_i32_1 = arith.constant 0 : i32
    %c0_i32_2 = arith.constant 0 : i32
    return %c0_i32, %c0_i32_0, %c0_i32_1 : i32, i32, i32
  }
  func.func @transform_12(%arg0: i32) -> (i32, i32, i32) {
    %c0_i32 = arith.constant 0 : i32
    %c0_i32_0 = arith.constant 0 : i32
    %c0_i32_1 = arith.constant 0 : i32
    %c0_i32_2 = arith.constant 0 : i32
    return %c0_i32, %c0_i32_0, %c0_i32_1 : i32, i32, i32
  }
  func.func @transform_13(%arg0: i32) -> (i32, i32, i32) {
    %c0_i32 = arith.constant 0 : i32
    %c0_i32_0 = arith.constant 0 : i32
    %c0_i32_1 = arith.constant 0 : i32
    %c0_i32_2 = arith.constant 0 : i32
    return %c0_i32, %c0_i32_0, %c0_i32_1 : i32, i32, i32
  }
  func.func @transform_14(%arg0: i32) -> (i32, i32, i32) {
    %c0_i32 = arith.constant 0 : i32
    %c0_i32_0 = arith.constant 0 : i32
    %c0_i32_1 = arith.constant 0 : i32
    %c0_i32_2 = arith.constant 0 : i32
    return %c0_i32, %c0_i32_0, %c0_i32_1 : i32, i32, i32
  }
  func.func @transform_15(%arg0: i32) -> (i32, i32) {
    %c0_i32 = arith.constant 0 : i32
    %c0_i32_0 = arith.constant 0 : i32
    %c0_i32_1 = arith.constant 0 : i32
    return %c0_i32, %c0_i32_0 : i32, i32
  }
  func.func @transform_16(%arg0: i32) -> (i32, i32) {
    %c0_i32 = arith.constant 0 : i32
    %c0_i32_0 = arith.constant 0 : i32
    %c0_i32_1 = arith.constant 0 : i32
    return %c0_i32, %c0_i32_0 : i32, i32
  }
  func.func @transform_17(%arg0: i32) -> (i32, i32, i32) {
    %c0_i32 = arith.constant 0 : i32
    %c0_i32_0 = arith.constant 0 : i32
    %c0_i32_1 = arith.constant 0 : i32
    return %arg0, %c0_i32, %c0_i32_0 : i32, i32, i32
  }
}

</mosaic_0001>

<llo_original>
// kernel: tpu_custom_call.1
$region0: #{tpu_custom_call.1}
  #allocation0 [shape = 'u32[]', space=smem, size = 0x4, offset = 0x4, fixed_abs, tag = 'smem constant byte address 0x4 - core index']
  #allocation1 [shape = 'u32[144,128]{1,0:T(1,128)}', space=vmem, size = 0x12000, scoped, tag = 'internal scratch']
  #allocation2 [shape = 'f32[8,32]{1,0:T(8,128)}', space=vmem, size = 0x1000, scoped, tag = 'scratch operand']
  #allocation3 [shape = 'f32[8,128]{1,0:T(8,128)}', space=vmem, size = 0x1000, scoped, tag = 'scratch operand']
  %s0 = inlined_call_operand.vmem [shape: f32[2,8,32], index: 0, kind: input, shape index: {}]
  %s1 = inlined_call_operand.vmem [shape: f32[8,32], index: 1, kind: input, shape index: {}]
  %s2 = inlined_call_operand.vmem [shape: f32[2,32,128], index: 2, kind: input, shape index: {}]
  %s3 = inlined_call_operand.vmem [shape: f32[2,32,128], index: 3, kind: input, shape index: {}]
  %s4 = inlined_call_operand.vmem [shape: f32[2,32,128], index: 4, kind: input, shape index: {}]
  %s5 = inlined_call_operand.vmem [shape: f32[2,128,32], index: 5, kind: input, shape index: {}]
  %s6 = inlined_call_operand.vmem [shape: f32[2,1,32], index: 6, kind: input, shape index: {}]
  %s7 = inlined_call_operand.vmem [shape: f32[2,1,32], index: 7, kind: input, shape index: {}]
  %s8 = inlined_call_operand.vmem [shape: f32[2,1,32], index: 8, kind: input, shape index: {}]
  %s9 = inlined_call_operand.vmem [shape: f32[2,32,128], index: 9, kind: input, shape index: {}]
  %s10 = inlined_call_operand.vmem [shape: f32[2,1,128], index: 10, kind: input, shape index: {}]
  %s11 = inlined_call_operand.vmem [shape: f32[2,128,32], index: 11, kind: input, shape index: {}]
  %s12 = inlined_call_operand.vmem [shape: f32[2,1,32], index: 12, kind: input, shape index: {}]
  %s13 = inlined_call_operand.vmem [shape: f32[2,1,32], index: 13, kind: input, shape index: {}]
  %s14 = inlined_call_operand.vmem [shape: f32[2,1,32], index: 14, kind: input, shape index: {}]
  %s15 = inlined_call_operand.vmem [shape: f32[32,128], index: 15, kind: input, shape index: {}]
  %s16 = inlined_call_operand.vmem [shape: f32[1,128], index: 16, kind: input, shape index: {}]
  %s17 = inlined_call_operand.hbm [shape: f32[2,1,128], index: 17, kind: output, shape index: {}]
  %s18 = sld [smem:[#allocation0]]
  $region108: #{tpu_custom_call.1} parent=0
    _
  %s20 = ssub.s32 1, %s18
  %s21 = scalar_select 0, %s20, %s18
  $region1: #{tpu_custom_call.1} parent=0
    #allocation4 [shape = 'u8[1024]{0}', space=vmem, size = 0x400, scoped, tag = 'output window, operand 0']
    #allocation5 [shape = 's32[2]{0}', space=sflag, size = 0x8, scoped, tag = 'scoped memory for tpu_custom_call.1']
    %22 = vsyncpa [#allocation5], 0
    %s23 = scalar_lea.sflag [#allocation5], 1
    %24 = vsyncpa %s23, 0
    loop: start=0, step=1, limit=4
    $region2: #{tpu_custom_call.1} parent=1 // loop_pre_header
      _
    $region3: #{tpu_custom_call.1} parent=1 // loop_header
      %s26 = sphi 0, %s30
      %p27 = scmp.ge.s32.totalorder %s26, 4
      %s36 = sphi 0, %s38
      %s39 = sphi 0, %s36
      %s40 = sphi 0, %s39
      %s56 = sphi 0, %s40
      %s60 = sphi 0, %s60
      %s62 = sphi 0, %s60
      %s63 = sphi 0, %s62
      %s77 = sphi 0, %s63
      %s81 = sphi 0, %s81
      %s83 = sphi 0, %s81
      %s84 = sphi 0, %s83
      %s98 = sphi 0, %s84
      %s102 = sphi 0, %s102
      %s104 = sphi 0, %s102
      %s105 = sphi 0, %s104
      %s119 = sphi 0, %s105
      %s123 = sphi 0, %s123
      %s125 = sphi 0, %s123
      %s126 = sphi 0, %s125
      %s140 = sphi 0, %s126
      %s144 = sphi 0, %s144
      %s146 = sphi 0, %s144
      %s147 = sphi 0, %s146
      %s161 = sphi 0, %s147
      %s165 = sphi 0, %s165
      %s167 = sphi 0, %s165
      %s168 = sphi 0, %s167
      %s182 = sphi 0, %s168
      %s186 = sphi 0, %s186
      %s188 = sphi 0, %s186
      %s189 = sphi 0, %s188
      %s203 = sphi 0, %s189
      %s207 = sphi 0, %s207
      %s209 = sphi 0, %s207
      %s210 = sphi 0, %s209
      %s224 = sphi 0, %s210
      %s228 = sphi 0, %s228
      %s230 = sphi 0, %s228
      %s231 = sphi 0, %s230
      %s245 = sphi 0, %s231
      %s249 = sphi 0, %s249
      %s251 = sphi 0, %s249
      %s252 = sphi 0, %s251
      %s266 = sphi 0, %s252
      %s270 = sphi 0, %s270
      %s272 = sphi 0, %s270
      %s273 = sphi 0, %s272
      %s287 = sphi 0, %s273
      %s291 = sphi 0, %s291
      %s293 = sphi 0, %s291
      %s294 = sphi 0, %s293
      %s308 = sphi 0, %s294
      %s312 = sphi 0, %s312
      %s314 = sphi 0, %s312
      %s315 = sphi 0, %s314
      %s329 = sphi 0, %s315
      %s333 = sphi 0, %s333
      %s335 = sphi 0, %s333
      %s336 = sphi 0, %s335
      %s350 = sphi 0, %s336
      %s354 = sphi 0, %s354
      %s356 = sphi 0, %s354
      %s357 = sphi 0, %s356
      %s371 = sphi 0, %s357
      %s375 = sphi 0, %s375
      %s377 = sphi 0, %s375
      %s378 = sphi 0, %s377
      %s392 = sphi 0, %s378
      %s398 = sphi 0, %s400
      %s401 = sphi 0, %s398
      %s402 = sphi 0, %s401
      %s418 = sphi 0, %s402
    $region4: #{tpu_custom_call.1} parent=1 // loop_header_branch
      %29 = sbr.rel (%p27) target = $region8
    $region5: #{tpu_custom_call.1} parent=1 // loop_body
      %s31 = ssub.s32 %s26, 1
      %s32 = ssub.s32 %s26, 2
      %s33 = sadd.s32 %s26, 1
      %s34 = ssub.s32 %s26, %s33
      %p35 = scmp.eq.s32.totalorder %s34, 0
      %s37 = sadd.s32 %s36, 1
      %s38 = scalar_select %p35, %s36, %s37
      %p41 = pneg %p35
      %p42 = scmp.eq.s32.totalorder %s26, 1
      %p43 = por %p41, %p42
      %p44 = scmp.ne.s32.totalorder %s36, %s39
      %p45 = scmp.eq.s32.totalorder %s26, 0
      %p46 = por %p44, %p45
      %p47 = scmp.ne.s32.totalorder %s36, %s39
      %p48 = scmp.eq.s32.totalorder %s31, 1
      %p49 = por %p47, %p48
      %p50 = scmp.ne.s32.totalorder %s39, %s40
      %p51 = scmp.eq.s32.totalorder %s31, 0
      %p52 = por %p50, %p51
      %p53 = scmp.ne.s32.totalorder %s39, %s40
      %p54 = scmp.eq.s32.totalorder %s32, 1
      %p55 = por %p53, %p54
      %p57 = scmp.ne.s32.totalorder %s40, %s56
      %p58 = scmp.eq.s32.totalorder %s32, 0
      %p59 = por %p57, %p58
      %s61 = sadd.s32 %s60, 1
      %p64 = scmp.eq.s32.totalorder %s26, 1
      %p65 = scmp.ne.s32.totalorder %s60, %s62
      %p66 = scmp.eq.s32.totalorder %s26, 0
      %p67 = por %p65, %p66
      %p68 = scmp.ne.s32.totalorder %s60, %s62
      %p69 = scmp.eq.s32.totalorder %s31, 1
      %p70 = por %p68, %p69
      %p71 = scmp.ne.s32.totalorder %s62, %s63
      %p72 = scmp.eq.s32.totalorder %s31, 0
      %p73 = por %p71, %p72
      %p74 = scmp.ne.s32.totalorder %s62, %s63
      %p75 = scmp.eq.s32.totalorder %s32, 1
      %p76 = por %p74, %p75
      %p78 = scmp.ne.s32.totalorder %s63, %s77
      %p79 = scmp.eq.s32.totalorder %s32, 0
      %p80 = por %p78, %p79
      %s82 = sadd.s32 %s81, 1
      %p85 = scmp.eq.s32.totalorder %s26, 1
      %p86 = scmp.ne.s32.totalorder %s81, %s83
      %p87 = scmp.eq.s32.totalorder %s26, 0
      %p88 = por %p86, %p87
      %p89 = scmp.ne.s32.totalorder %s81, %s83
      %p90 = scmp.eq.s32.totalorder %s31, 1
      %p91 = por %p89, %p90
      %p92 = scmp.ne.s32.totalorder %s83, %s84
      %p93 = scmp.eq.s32.totalorder %s31, 0
      %p94 = por %p92, %p93
      %p95 = scmp.ne.s32.totalorder %s83, %s84
      %p96 = scmp.eq.s32.totalorder %s32, 1
      %p97 = por %p95, %p96
      %p99 = scmp.ne.s32.totalorder %s84, %s98
      %p100 = scmp.eq.s32.totalorder %s32, 0
      %p101 = por %p99, %p100
      %s103 = sadd.s32 %s102, 1
      %p106 = scmp.eq.s32.totalorder %s26, 1
      %p107 = scmp.ne.s32.totalorder %s102, %s104
      %p108 = scmp.eq.s32.totalorder %s26, 0
      %p109 = por %p107, %p108
      %p110 = scmp.ne.s32.totalorder %s102, %s104
      %p111 = scmp.eq.s32.totalorder %s31, 1
      %p112 = por %p110, %p111
      %p113 = scmp.ne.s32.totalorder %s104, %s105
      %p114 = scmp.eq.s32.totalorder %s31, 0
      %p115 = por %p113, %p114
      %p116 = scmp.ne.s32.totalorder %s104, %s105
      %p117 = scmp.eq.s32.totalorder %s32, 1
      %p118 = por %p116, %p117
      %p120 = scmp.ne.s32.totalorder %s105, %s119
      %p121 = scmp.eq.s32.totalorder %s32, 0
      %p122 = por %p120, %p121
      %s124 = sadd.s32 %s123, 1
      %p127 = scmp.eq.s32.totalorder %s26, 1
      %p128 = scmp.ne.s32.totalorder %s123, %s125
      %p129 = scmp.eq.s32.totalorder %s26, 0
      %p130 = por %p128, %p129
      %p131 = scmp.ne.s32.totalorder %s123, %s125
      %p132 = scmp.eq.s32.totalorder %s31, 1
      %p133 = por %p131, %p132
      %p134 = scmp.ne.s32.totalorder %s125, %s126
      %p135 = scmp.eq.s32.totalorder %s31, 0
      %p136 = por %p134, %p135
      %p137 = scmp.ne.s32.totalorder %s125, %s126
      %p138 = scmp.eq.s32.totalorder %s32, 1
      %p139 = por %p137, %p138
      %p141 = scmp.ne.s32.totalorder %s126, %s140
      %p142 = scmp.eq.s32.totalorder %s32, 0
      %p143 = por %p141, %p142
      %s145 = sadd.s32 %s144, 1
      %p148 = scmp.eq.s32.totalorder %s26, 1
      %p149 = scmp.ne.s32.totalorder %s144, %s146
      %p150 = scmp.eq.s32.totalorder %s26, 0
      %p151 = por %p149, %p150
      %p152 = scmp.ne.s32.totalorder %s144, %s146
      %p153 = scmp.eq.s32.totalorder %s31, 1
      %p154 = por %p152, %p153
      %p155 = scmp.ne.s32.totalorder %s146, %s147
      %p156 = scmp.eq.s32.totalorder %s31, 0
      %p157 = por %p155, %p156
      %p158 = scmp.ne.s32.totalorder %s146, %s147
      %p159 = scmp.eq.s32.totalorder %s32, 1
      %p160 = por %p158, %p159
      %p162 = scmp.ne.s32.totalorder %s147, %s161
      %p163 = scmp.eq.s32.totalorder %s32, 0
      %p164 = por %p162, %p163
      %s166 = sadd.s32 %s165, 1
      %p169 = scmp.eq.s32.totalorder %s26, 1
      %p170 = scmp.ne.s32.totalorder %s165, %s167
      %p171 = scmp.eq.s32.totalorder %s26, 0
      %p172 = por %p170, %p171
      %p173 = scmp.ne.s32.totalorder %s165, %s167
      %p174 = scmp.eq.s32.totalorder %s31, 1
      %p175 = por %p173, %p174
      %p176 = scmp.ne.s32.totalorder %s167, %s168
      %p177 = scmp.eq.s32.totalorder %s31, 0
      %p178 = por %p176, %p177
      %p179 = scmp.ne.s32.totalorder %s167, %s168
      %p180 = scmp.eq.s32.totalorder %s32, 1
      %p181 = por %p179, %p180
      %p183 = scmp.ne.s32.totalorder %s168, %s182
      %p184 = scmp.eq.s32.totalorder %s32, 0
      %p185 = por %p183, %p184
      %s187 = sadd.s32 %s186, 1
      %p190 = scmp.eq.s32.totalorder %s26, 1
      %p191 = scmp.ne.s32.totalorder %s186, %s188
      %p192 = scmp.eq.s32.totalorder %s26, 0
      %p193 = por %p191, %p192
      %p194 = scmp.ne.s32.totalorder %s186, %s188
      %p195 = scmp.eq.s32.totalorder %s31, 1
      %p196 = por %p194, %p195
      %p197 = scmp.ne.s32.totalorder %s188, %s189
      %p198 = scmp.eq.s32.totalorder %s31, 0
      %p199 = por %p197, %p198
      %p200 = scmp.ne.s32.totalorder %s188, %s189
      %p201 = scmp.eq.s32.totalorder %s32, 1
      %p202 = por %p200, %p201
      %p204 = scmp.ne.s32.totalorder %s189, %s203
      %p205 = scmp.eq.s32.totalorder %s32, 0
      %p206 = por %p204, %p205
      %s208 = sadd.s32 %s207, 1
      %p211 = scmp.eq.s32.totalorder %s26, 1
      %p212 = scmp.ne.s32.totalorder %s207, %s209
      %p213 = scmp.eq.s32.totalorder %s26, 0
      %p214 = por %p212, %p213
      %p215 = scmp.ne.s32.totalorder %s207, %s209
      %p216 = scmp.eq.s32.totalorder %s31, 1
      %p217 = por %p215, %p216
      %p218 = scmp.ne.s32.totalorder %s209, %s210
      %p219 = scmp.eq.s32.totalorder %s31, 0
      %p220 = por %p218, %p219
      %p221 = scmp.ne.s32.totalorder %s209, %s210
      %p222 = scmp.eq.s32.totalorder %s32, 1
      %p223 = por %p221, %p222
      %p225 = scmp.ne.s32.totalorder %s210, %s224
      %p226 = scmp.eq.s32.totalorder %s32, 0
      %p227 = por %p225, %p226
      %s229 = sadd.s32 %s228, 1
      %p232 = scmp.eq.s32.totalorder %s26, 1
      %p233 = scmp.ne.s32.totalorder %s228, %s230
      %p234 = scmp.eq.s32.totalorder %s26, 0
      %p235 = por %p233, %p234
      %p236 = scmp.ne.s32.totalorder %s228, %s230
      %p237 = scmp.eq.s32.totalorder %s31, 1
      %p238 = por %p236, %p237
      %p239 = scmp.ne.s32.totalorder %s230, %s231
      %p240 = scmp.eq.s32.totalorder %s31, 0
      %p241 = por %p239, %p240
      %p242 = scmp.ne.s32.totalorder %s230, %s231
      %p243 = scmp.eq.s32.totalorder %s32, 1
      %p244 = por %p242, %p243
      %p246 = scmp.ne.s32.totalorder %s231, %s245
      %p247 = scmp.eq.s32.totalorder %s32, 0
      %p248 = por %p246, %p247
      %s250 = sadd.s32 %s249, 1
      %p253 = scmp.eq.s32.totalorder %s26, 1
      %p254 = scmp.ne.s32.totalorder %s249, %s251
      %p255 = scmp.eq.s32.totalorder %s26, 0
      %p256 = por %p254, %p255
      %p257 = scmp.ne.s32.totalorder %s249, %s251
      %p258 = scmp.eq.s32.totalorder %s31, 1
      %p259 = por %p257, %p258
      %p260 = scmp.ne.s32.totalorder %s251, %s252
      %p261 = scmp.eq.s32.totalorder %s31, 0
      %p262 = por %p260, %p261
      %p263 = scmp.ne.s32.totalorder %s251, %s252
      %p264 = scmp.eq.s32.totalorder %s32, 1
      %p265 = por %p263, %p264
      %p267 = scmp.ne.s32.totalorder %s252, %s266
      %p268 = scmp.eq.s32.totalorder %s32, 0
      %p269 = por %p267, %p268
      %s271 = sadd.s32 %s270, 1
      %p274 = scmp.eq.s32.totalorder %s26, 1
      %p275 = scmp.ne.s32.totalorder %s270, %s272
      %p276 = scmp.eq.s32.totalorder %s26, 0
      %p277 = por %p275, %p276
      %p278 = scmp.ne.s32.totalorder %s270, %s272
      %p279 = scmp.eq.s32.totalorder %s31, 1
      %p280 = por %p278, %p279
      %p281 = scmp.ne.s32.totalorder %s272, %s273
      %p282 = scmp.eq.s32.totalorder %s31, 0
      %p283 = por %p281, %p282
      %p284 = scmp.ne.s32.totalorder %s272, %s273
      %p285 = scmp.eq.s32.totalorder %s32, 1
      %p286 = por %p284, %p285
      %p288 = scmp.ne.s32.totalorder %s273, %s287
      %p289 = scmp.eq.s32.totalorder %s32, 0
      %p290 = por %p288, %p289
      %s292 = sadd.s32 %s291, 1
      %p295 = scmp.eq.s32.totalorder %s26, 1
      %p296 = scmp.ne.s32.totalorder %s291, %s293
      %p297 = scmp.eq.s32.totalorder %s26, 0
      %p298 = por %p296, %p297
      %p299 = scmp.ne.s32.totalorder %s291, %s293
      %p300 = scmp.eq.s32.totalorder %s31, 1
      %p301 = por %p299, %p300
      %p302 = scmp.ne.s32.totalorder %s293, %s294
      %p303 = scmp.eq.s32.totalorder %s31, 0
      %p304 = por %p302, %p303
      %p305 = scmp.ne.s32.totalorder %s293, %s294
      %p306 = scmp.eq.s32.totalorder %s32, 1
      %p307 = por %p305, %p306
      %p309 = scmp.ne.s32.totalorder %s294, %s308
      %p310 = scmp.eq.s32.totalorder %s32, 0
      %p311 = por %p309, %p310
      %s313 = sadd.s32 %s312, 1
      %p316 = scmp.eq.s32.totalorder %s26, 1
      %p317 = scmp.ne.s32.totalorder %s312, %s314
      %p318 = scmp.eq.s32.totalorder %s26, 0
      %p319 = por %p317, %p318
      %p320 = scmp.ne.s32.totalorder %s312, %s314
      %p321 = scmp.eq.s32.totalorder %s31, 1
      %p322 = por %p320, %p321
      %p323 = scmp.ne.s32.totalorder %s314, %s315
      %p324 = scmp.eq.s32.totalorder %s31, 0
      %p325 = por %p323, %p324
      %p326 = scmp.ne.s32.totalorder %s314, %s315
      %p327 = scmp.eq.s32.totalorder %s32, 1
      %p328 = por %p326, %p327
      %p330 = scmp.ne.s32.totalorder %s315, %s329
      %p331 = scmp.eq.s32.totalorder %s32, 0
      %p332 = por %p330, %p331
      %s334 = sadd.s32 %s333, 1
      %p337 = scmp.eq.s32.totalorder %s26, 1
      %p338 = scmp.ne.s32.totalorder %s333, %s335
      %p339 = scmp.eq.s32.totalorder %s26, 0
      %p340 = por %p338, %p339
      %p341 = scmp.ne.s32.totalorder %s333, %s335
      %p342 = scmp.eq.s32.totalorder %s31, 1
      %p343 = por %p341, %p342
      %p344 = scmp.ne.s32.totalorder %s335, %s336
      %p345 = scmp.eq.s32.totalorder %s31, 0
      %p346 = por %p344, %p345
      %p347 = scmp.ne.s32.totalorder %s335, %s336
      %p348 = scmp.eq.s32.totalorder %s32, 1
      %p349 = por %p347, %p348
      %p351 = scmp.ne.s32.totalorder %s336, %s350
      %p352 = scmp.eq.s32.totalorder %s32, 0
      %p353 = por %p351, %p352
      %s355 = sadd.s32 %s354, 1
      %p358 = scmp.eq.s32.totalorder %s26, 1
      %p359 = scmp.ne.s32.totalorder %s354, %s356
      %p360 = scmp.eq.s32.totalorder %s26, 0
      %p361 = por %p359, %p360
      %p362 = scmp.ne.s32.totalorder %s354, %s356
      %p363 = scmp.eq.s32.totalorder %s31, 1
      %p364 = por %p362, %p363
      %p365 = scmp.ne.s32.totalorder %s356, %s357
      %p366 = scmp.eq.s32.totalorder %s31, 0
      %p367 = por %p365, %p366
      %p368 = scmp.ne.s32.totalorder %s356, %s357
      %p369 = scmp.eq.s32.totalorder %s32, 1
      %p370 = por %p368, %p369
      %p372 = scmp.ne.s32.totalorder %s357, %s371
      %p373 = scmp.eq.s32.totalorder %s32, 0
      %p374 = por %p372, %p373
      %s376 = sadd.s32 %s375, 1
      %p379 = scmp.eq.s32.totalorder %s26, 1
      %p380 = scmp.ne.s32.totalorder %s375, %s377
      %p381 = scmp.eq.s32.totalorder %s26, 0
      %p382 = por %p380, %p381
      %p383 = scmp.ne.s32.totalorder %s375, %s377
      %p384 = scmp.eq.s32.totalorder %s31, 1
      %p385 = por %p383, %p384
      %p386 = scmp.ne.s32.totalorder %s377, %s378
      %p387 = scmp.eq.s32.totalorder %s31, 0
      %p388 = por %p386, %p387
      %p389 = scmp.ne.s32.totalorder %s377, %s378
      %p390 = scmp.eq.s32.totalorder %s32, 1
      %p391 = por %p389, %p390
      %p393 = scmp.ne.s32.totalorder %s378, %s392
      %p394 = scmp.eq.s32.totalorder %s32, 0
      %p395 = por %p393, %p394
      %s396 = ssub.s32 %s26, %s33
      %p397 = scmp.eq.s32.totalorder %s396, 0
      %s399 = sadd.s32 %s398, 1
      %s400 = scalar_select %p397, %s398, %s399
      %p403 = pneg %p397
      %p404 = scmp.eq.s32.totalorder %s26, 1
      %p405 = por %p403, %p404
      %p406 = scmp.ne.s32.totalorder %s398, %s401
      %p407 = scmp.eq.s32.totalorder %s26, 0
      %p408 = por %p406, %p407
      %p409 = scmp.ne.s32.totalorder %s398, %s401
      %p410 = scmp.eq.s32.totalorder %s31, 1
      %p411 = por %p409, %p410
      %p412 = scmp.ne.s32.totalorder %s401, %s402
      %p413 = scmp.eq.s32.totalorder %s31, 0
      %p414 = por %p412, %p413
      %p415 = scmp.ne.s32.totalorder %s401, %s402
      %p416 = scmp.eq.s32.totalorder %s32, 1
      %p417 = por %p415, %p416
      %p419 = scmp.ne.s32.totalorder %s402, %s418
      %p420 = scmp.eq.s32.totalorder %s32, 0
      %p421 = por %p419, %p420
      %p422 = scmp.le.s32.totalorder 1, %s26
      %p423 = scmp.lt.s32.totalorder %s26, 3
      %p424 = pnand %p422, %p423
      %p425 = pneg %p424
      // Predicated region
      $region9: #{tpu_custom_call.1} parent=5 // pred_check
        _
      $region10: #{tpu_custom_call.1} parent=5 // pred_check_branch
        %427 = sbr.rel (%p424) target = $region12
      $region11: #{tpu_custom_call.1} parent=5 // pred_region
        %s428 = ssub.s32 %s26, 1
        // Predicated region
        $region13: #{tpu_custom_call.1} parent=11 // pred_check
          %p429 = pneg %p73
        $region14: #{tpu_custom_call.1} parent=11 // pred_check_branch
          %431 = sbr.rel (%p429) target = $region16
        $region15: #{tpu_custom_call.1} parent=11 // pred_region
          _
        $region16: #{tpu_custom_call.1} parent=11 // pred_fallthru
          _
        // Predicated region
        $region17: #{tpu_custom_call.1} parent=11 // pred_check
          %p432 = pneg %p94
        $region18: #{tpu_custom_call.1} parent=11 // pred_check_branch
          %434 = sbr.rel (%p432) target = $region20
        $region19: #{tpu_custom_call.1} parent=11 // pred_region
          _
        $region20: #{tpu_custom_call.1} parent=11 // pred_fallthru
          _
        // Predicated region
        $region21: #{tpu_custom_call.1} parent=11 // pred_check
          %p435 = pneg %p115
        $region22: #{tpu_custom_call.1} parent=11 // pred_check_branch
          %437 = sbr.rel (%p435) target = $region24
        $region23: #{tpu_custom_call.1} parent=11 // pred_region
          _
        $region24: #{tpu_custom_call.1} parent=11 // pred_fallthru
          _
        // Predicated region
        $region25: #{tpu_custom_call.1} parent=11 // pred_check
          %p438 = pneg %p136
        $region26: #{tpu_custom_call.1} parent=11 // pred_check_branch
          %440 = sbr.rel (%p438) target = $region28
        $region27: #{tpu_custom_call.1} parent=11 // pred_region
          _
        $region28: #{tpu_custom_call.1} parent=11 // pred_fallthru
          _
        // Predicated region
        $region29: #{tpu_custom_call.1} parent=11 // pred_check
          %p441 = pneg %p157
        $region30: #{tpu_custom_call.1} parent=11 // pred_check_branch
          %443 = sbr.rel (%p441) target = $region32
        $region31: #{tpu_custom_call.1} parent=11 // pred_region
          _
        $region32: #{tpu_custom_call.1} parent=11 // pred_fallthru
          _
        // Predicated region
        $region33: #{tpu_custom_call.1} parent=11 // pred_check
          %p444 = pneg %p178
        $region34: #{tpu_custom_call.1} parent=11 // pred_check_branch
          %446 = sbr.rel (%p444) target = $region36
        $region35: #{tpu_custom_call.1} parent=11 // pred_region
          _
        $region36: #{tpu_custom_call.1} parent=11 // pred_fallthru
          _
        // Predicated region
        $region37: #{tpu_custom_call.1} parent=11 // pred_check
          %p447 = pneg %p199
        $region38: #{tpu_custom_call.1} parent=11 // pred_check_branch
          %449 = sbr.rel (%p447) target = $region40
        $region39: #{tpu_custom_call.1} parent=11 // pred_region
          _
        $region40: #{tpu_custom_call.1} parent=11 // pred_fallthru
          _
        // Predicated region
        $region41: #{tpu_custom_call.1} parent=11 // pred_check
          %p450 = pneg %p220
        $region42: #{tpu_custom_call.1} parent=11 // pred_check_branch
          %452 = sbr.rel (%p450) target = $region44
        $region43: #{tpu_custom_call.1} parent=11 // pred_region
          _
        $region44: #{tpu_custom_call.1} parent=11 // pred_fallthru
          _
        // Predicated region
        $region45: #{tpu_custom_call.1} parent=11 // pred_check
          %p453 = pneg %p241
        $region46: #{tpu_custom_call.1} parent=11 // pred_check_branch
          %455 = sbr.rel (%p453) target = $region48
        $region47: #{tpu_custom_call.1} parent=11 // pred_region
          _
        $region48: #{tpu_custom_call.1} parent=11 // pred_fallthru
          _
        // Predicated region
        $region49: #{tpu_custom_call.1} parent=11 // pred_check
          %p456 = pneg %p262
        $region50: #{tpu_custom_call.1} parent=11 // pred_check_branch
          %458 = sbr.rel (%p456) target = $region52
        $region51: #{tpu_custom_call.1} parent=11 // pred_region
          _
        $region52: #{tpu_custom_call.1} parent=11 // pred_fallthru
          _
        // Predicated region
        $region53: #{tpu_custom_call.1} parent=11 // pred_check
          %p459 = pneg %p283
        $region54: #{tpu_custom_call.1} parent=11 // pred_check_branch
          %461 = sbr.rel (%p459) target = $region56
        $region55: #{tpu_custom_call.1} parent=11 // pred_region
          _
        $region56: #{tpu_custom_call.1} parent=11 // pred_fallthru
          _
        // Predicated region
        $region57: #{tpu_custom_call.1} parent=11 // pred_check
          %p462 = pneg %p304
        $region58: #{tpu_custom_call.1} parent=11 // pred_check_branch
          %464 = sbr.rel (%p462) target = $region60
        $region59: #{tpu_custom_call.1} parent=11 // pred_region
          _
        $region60: #{tpu_custom_call.1} parent=11 // pred_fallthru
          _
        // Predicated region
        $region61: #{tpu_custom_call.1} parent=11 // pred_check
          %p465 = pneg %p325
        $region62: #{tpu_custom_call.1} parent=11 // pred_check_branch
          %467 = sbr.rel (%p465) target = $region64
        $region63: #{tpu_custom_call.1} parent=11 // pred_region
          _
        $region64: #{tpu_custom_call.1} parent=11 // pred_fallthru
          _
        // Predicated region
        $region65: #{tpu_custom_call.1} parent=11 // pred_check
          %p468 = pneg %p346
        $region66: #{tpu_custom_call.1} parent=11 // pred_check_branch
          %470 = sbr.rel (%p468) target = $region68
        $region67: #{tpu_custom_call.1} parent=11 // pred_region
          _
        $region68: #{tpu_custom_call.1} parent=11 // pred_fallthru
          _
        // Predicated region
        $region69: #{tpu_custom_call.1} parent=11 // pred_check
          %p471 = pneg %p367
        $region70: #{tpu_custom_call.1} parent=11 // pred_check_branch
          %473 = sbr.rel (%p471) target = $region72
        $region71: #{tpu_custom_call.1} parent=11 // pred_region
          _
        $region72: #{tpu_custom_call.1} parent=11 // pred_fallthru
          _
        // Predicated region
        $region73: #{tpu_custom_call.1} parent=11 // pred_check
          %p474 = pneg %p388
        $region74: #{tpu_custom_call.1} parent=11 // pred_check_branch
          %476 = sbr.rel (%p474) target = $region76
        $region75: #{tpu_custom_call.1} parent=11 // pred_region
          _
        $region76: #{tpu_custom_call.1} parent=11 // pred_fallthru
          _
      $region12: #{tpu_custom_call.1} parent=5 // pred_fallthru
        _
      %p477 = scmp.lt.s32.totalorder %s26, 2
      // Predicated region
      $region77: #{tpu_custom_call.1} parent=5 // pred_check
        %p478 = pneg %p477
      $region78: #{tpu_custom_call.1} parent=5 // pred_check_branch
        %480 = sbr.rel (%p478) target = $region80
      $region79: #{tpu_custom_call.1} parent=5 // pred_region
        // Predicated region
        $region81: #{tpu_custom_call.1} parent=79 // pred_check
          %p481 = pneg %p46
        $region82: #{tpu_custom_call.1} parent=79 // pred_check_branch
          %483 = sbr.rel (%p481) target = $region84
        $region83: #{tpu_custom_call.1} parent=79 // pred_region
          %p484 = scmp.lt.s32.totalorder %s26, 1
          %s485 = scalar_select %p484, %s26, 1
          %s486 = smul.addr %s485, 8
          %s487 = scalar_lea.vmem %s0, %s486
        $region84: #{tpu_custom_call.1} parent=79 // pred_fallthru
          _
      $region80: #{tpu_custom_call.1} parent=5 // pred_fallthru
        _
      %p488 = scmp.le.s32.totalorder 1, %s26
      %p489 = scmp.lt.s32.totalorder %s26, 3
      %p490 = pnand %p488, %p489
      %p491 = pneg %p490
      // Predicated region
      $region85: #{tpu_custom_call.1} parent=5 // pred_check
        _
      $region86: #{tpu_custom_call.1} parent=5 // pred_check_branch
        %493 = sbr.rel (%p490) target = $region88
      $region87: #{tpu_custom_call.1} parent=5 // pred_region
        %s494 = ssub.s32 %s26, 1
        %p495 = scmp.lt.s32.totalorder %s31, 1
        %s496 = scalar_select %p495, %s31, 1
        %s497 = smul.addr %s496, 8
        %s498 = scalar_lea.vmem %s0, %s497
        %p499 = pneg %p52
        %p500 = pneg %p49
        %p501 = pneg %p73
        %p502 = pneg %p70
        %p503 = pneg %p94
        %p504 = pneg %p91
        %p505 = pneg %p115
        %p506 = pneg %p112
        %p507 = pneg %p136
        %p508 = pneg %p133
        %p509 = pneg %p157
        %p510 = pneg %p154
        %p511 = pneg %p178
        %p512 = pneg %p175
        %p513 = pneg %p199
        %p514 = pneg %p196
        %p515 = pneg %p220
        %p516 = pneg %p217
        %p517 = pneg %p241
        %p518 = pneg %p238
        %p519 = pneg %p262
        %p520 = pneg %p259
        %p521 = pneg %p283
        %p522 = pneg %p280
        %p523 = pneg %p304
        %p524 = pneg %p301
        %p525 = pneg %p325
        %p526 = pneg %p322
        %p527 = pneg %p346
        %p528 = pneg %p343
        %p529 = pneg %p367
        %p530 = pneg %p364
        %p531 = pneg %p388
        %p532 = pneg %p385
        %p533 = pneg %p414
        %p534 = pneg %p411
        %s535 = sand.u32 %s401, 1
        %s536 = scalar_lea.sflag [#allocation5], %s535
        %s537 = sand.u32 %s401, 1
        %s538 = scalar_lea.vmem [#allocation4], %s537
        %p539 = scmp.lt.s32.totalorder %s31, 1
        %s540 = scalar_select %p539, %s31, 1
        %s541 = smul.addr %s540, 8
        %s542 = scalar_lea.vmem %s0, %s541
        %v543 = vld [vmem:[%s542] sm:$0xff]
        %v544 = vld [vmem:[%s1] sm:$0xff]
        %v545 = vadd.f32 %v543, %v544
        %vm546 = vcmask 261120
        %547 = vst.msk [vmem:[#allocation2] sm:$0xff] %vm546, %v545
        loop: start=0, step=1, limit=2
        $region89: #{tpu_custom_call.1} parent=87 // loop_pre_header
          _
        $region90: #{tpu_custom_call.1} parent=87 // loop_header
          %s549 = sphi 0, %s553
          %p550 = scmp.ge.s32.totalorder %s549, 2
        $region91: #{tpu_custom_call.1} parent=87 // loop_header_branch
          %552 = sbr.rel (%p550) target = $region95
        $region92: #{tpu_custom_call.1} parent=87 // loop_body
          %v554 = vld [vmem:[#allocation2] sm:$0xff]
          %s555 = smul.u32 %s549, 32
          %s556 = scalar_lea.vmem %s2, %s555
          %v557 = vld [vmem:[%s556] sm:$0xff]
          %v558 = vld [vmem:[%s556 + $0x8] sm:$0xff]
          %v559 = vld [vmem:[%s556 + $0x10] sm:$0xff]
          %v560 = vld [vmem:[%s556 + $0x18] sm:$0xff]
          %v562 = vsel %vm546, %v554, 0
          %564 = vmatprep.subr.mxu0 0.0
          %565 = vmatpush1.msra.mxu0 %v557
          %566 = vmatprep.subr.mxu0 0.0
          %567 = vmatpush1.msra.mxu0 %v558
          %568 = vmatprep.subr.mxu0 0.0
          %569 = vmatpush1.msra.mxu0 %v559
          %570 = vmatprep.subr.mxu0 0.0
          %571 = vmatpush1.msra.mxu0 %v560
          %572 = vmatprep.subr.mxu0 0.0
          %573 = vmatpush1.msra.mxu0 0.0
          %574 = vmatprep.subr.mxu0 0.0
          %575 = vmatpush1.msra.mxu0 0.0
          %576 = vmatprep.subr.mxu0 0.0
          %577 = vmatpush1.msra.mxu0 0.0
          %578 = vmatprep.subr.mxu0 0.0
          %579 = vmatpush1.msra.mxu0 0.0
          %580 = vmatprep.subr.mxu0 0.0
          %581 = vmatpush1.msra.mxu0 0.0
          %582 = vmatprep.subr.mxu0 0.0
          %583 = vmatpush1.msra.mxu0 0.0
          %584 = vmatprep.subr.mxu0 0.0
          %585 = vmatpush1.msra.mxu0 0.0
          %586 = vmatprep.subr.mxu0 0.0
          %587 = vmatpush1.msra.mxu0 0.0
          %588 = vmatprep.subr.mxu0 0.0
          %589 = vmatpush1.msra.mxu0 0.0
          %590 = vmatprep.subr.mxu0 0.0
          %591 = vmatpush1.msra.mxu0 0.0
          %592 = vmatprep.subr.mxu0 0.0
          %593 = vmatpush1.msra.mxu0 0.0
          %594 = vmatprep.subr.mxu0 0.0
          %595 = vmatpush1.msra.mxu0 0.0
          %596 = vmatprep.subr.mxu0 0.0
          %597 = vmatpush1.msra.mxu0 0.0
          %598 = vmatprep.subr.mxu0 0.0
          %599 = vmatpush1.msra.mxu0 0.0
          %600 = vmatprep.subr.mxu0 0.0
          %601 = vmatpush1.msra.mxu0 0.0
          %602 = vmatprep.subr.mxu0 0.0
          %603 = vmatpush1.msra.mxu0 0.0
          %604 = vmatprep.subr.mxu0 0.0
          %605 = vmatpush1.msra.mxu0 0.0
          %606 = vmatprep.subr.mxu0 0.0
          %607 = vmatpush1.msra.mxu0 0.0
          %608 = vmatprep.subr.mxu0 0.0
          %609 = vmatpush1.msra.mxu0 0.0
          %610 = vmatprep.subr.mxu0 0.0
          %611 = vmatpush1.msra.mxu0 0.0
          %612 = vmatprep.subr.mxu0 0.0
          %613 = vmatpush1.msra.mxu0 0.0
          %614 = vmatprep.subr.mxu0 0.0
          %615 = vmatpush1.msra.mxu0 0.0
          %616 = vmatprep.subr.mxu0 0.0
          %617 = vmatpush1.msra.mxu0 0.0
          %618 = vmatprep.subr.mxu0 0.0
          %619 = vmatpush1.msra.mxu0 0.0
          %620 = vmatprep.subr.mxu0 0.0
          %621 = vmatpush1.msra.mxu0 0.0
          %622 = vmatprep.subr.mxu0 0.0
          %623 = vmatpush1.msra.mxu0 0.0
          %624 = vmatprep.subr.mxu0 0.0
          %625 = vmatpush1.msra.mxu0 0.0
          %626 = vmatprep.subr.mxu0 0.0
          %627 = vmatpush1.msra.mxu0 0.0
          %628 = vmatprep.mubr.f32.mxu0 0.0
          %629 = vmatmul.mubr.f32.gmra.mrb[0].mxu0 %v562
          %v630 = vpop.f32.mrb[0].mxu0
          %v631 = vadd.f32 0.0, %v630
          %v632 = vpop.f32.mrb[0].mxu0
          %633 = vdwg.mxu0
          %v634 = vmul.f32 %v631, 0.17677669
          %s635 = scalar_lea.vmem %s3, %s555
          %v636 = vld [vmem:[%s635] sm:$0xff]
          %v637 = vld [vmem:[%s635 + $0x8] sm:$0xff]
          %v638 = vld [vmem:[%s635 + $0x10] sm:$0xff]
          %v639 = vld [vmem:[%s635 + $0x18] sm:$0xff]
          %640 = vmatprep.subr.mxu0 0.0
          %641 = vmatpush1.msra.mxu0 %v636
          %642 = vmatprep.subr.mxu0 0.0
          %643 = vmatpush1.msra.mxu0 %v637
          %644 = vmatprep.subr.mxu0 0.0
          %645 = vmatpush1.msra.mxu0 %v638
          %646 = vmatprep.subr.mxu0 0.0
          %647 = vmatpush1.msra.mxu0 %v639
          %648 = vmatprep.subr.mxu0 0.0
          %649 = vmatpush1.msra.mxu0 0.0
          %650 = vmatprep.subr.mxu0 0.0
          %651 = vmatpush1.msra.mxu0 0.0
          %652 = vmatprep.subr.mxu0 0.0
          %653 = vmatpush1.msra.mxu0 0.0
          %654 = vmatprep.subr.mxu0 0.0
          %655 = vmatpush1.msra.mxu0 0.0
          %656 = vmatprep.subr.mxu0 0.0
          %657 = vmatpush1.msra.mxu0 0.0
          %658 = vmatprep.subr.mxu0 0.0
          %659 = vmatpush1.msra.mxu0 0.0
          %660 = vmatprep.subr.mxu0 0.0
          %661 = vmatpush1.msra.mxu0 0.0
          %662 = vmatprep.subr.mxu0 0.0
          %663 = vmatpush1.msra.mxu0 0.0
          %664 = vmatprep.subr.mxu0 0.0
          %665 = vmatpush1.msra.mxu0 0.0
          %666 = vmatprep.subr.mxu0 0.0
          %667 = vmatpush1.msra.mxu0 0.0
          %668 = vmatprep.subr.mxu0 0.0
          %669 = vmatpush1.msra.mxu0 0.0
          %670 = vmatprep.subr.mxu0 0.0
          %671 = vmatpush1.msra.mxu0 0.0
          %672 = vmatprep.subr.mxu0 0.0
          %673 = vmatpush1.msra.mxu0 0.0
          %674 = vmatprep.subr.mxu0 0.0
          %675 = vmatpush1.msra.mxu0 0.0
          %676 = vmatprep.subr.mxu0 0.0
          %677 = vmatpush1.msra.mxu0 0.0
          %678 = vmatprep.subr.mxu0 0.0
          %679 = vmatpush1.msra.mxu0 0.0
          %680 = vmatprep.subr.mxu0 0.0
          %681 = vmatpush1.msra.mxu0 0.0
          %682 = vmatprep.subr.mxu0 0.0
          %683 = vmatpush1.msra.mxu0 0.0
          %684 = vmatprep.subr.mxu0 0.0
          %685 = vmatpush1.msra.mxu0 0.0
          %686 = vmatprep.subr.mxu0 0.0
          %687 = vmatpush1.msra.mxu0 0.0
          %688 = vmatprep.subr.mxu0 0.0
          %689 = vmatpush1.msra.mxu0 0.0
          %690 = vmatprep.subr.mxu0 0.0
          %691 = vmatpush1.msra.mxu0 0.0
          %692 = vmatprep.subr.mxu0 0.0
          %693 = vmatpush1.msra.mxu0 0.0
          %694 = vmatprep.subr.mxu0 0.0
          %695 = vmatpush1.msra.mxu0 0.0
          %696 = vmatprep.subr.mxu0 0.0
          %697 = vmatpush1.msra.mxu0 0.0
          %698 = vmatprep.subr.mxu0 0.0
          %699 = vmatpush1.msra.mxu0 0.0
          %700 = vmatprep.subr.mxu0 0.0
          %701 = vmatpush1.msra.mxu0 0.0
          %702 = vmatprep.subr.mxu0 0.0
          %703 = vmatpush1.msra.mxu0 0.0
          %704 = vmatprep.mubr.f32.mxu0 0.0
          %705 = vmatmul.mubr.f32.gmra.mrb[0].mxu0 %v562
          %v706 = vpop.f32.mrb[0].mxu0
          %v707 = vadd.f32 0.0, %v706
          %v708 = vpop.f32.mrb[0].mxu0
          %709 = vdwg.mxu0
          %s710 = scalar_lea.vmem %s4, %s555
          %v711 = vld [vmem:[%s710] sm:$0xff]
          %v712 = vld [vmem:[%s710 + $0x8] sm:$0xff]
          %v713 = vld [vmem:[%s710 + $0x10] sm:$0xff]
          %v714 = vld [vmem:[%s710 + $0x18] sm:$0xff]
          %715 = vmatprep.subr.mxu0 0.0
          %716 = vmatpush1.msra.mxu0 %v711
          %717 = vmatprep.subr.mxu0 0.0
          %718 = vmatpush1.msra.mxu0 %v712
          %719 = vmatprep.subr.mxu0 0.0
          %720 = vmatpush1.msra.mxu0 %v713
          %721 = vmatprep.subr.mxu0 0.0
          %722 = vmatpush1.msra.mxu0 %v714
          %723 = vmatprep.subr.mxu0 0.0
          %724 = vmatpush1.msra.mxu0 0.0
          %725 = vmatprep.subr.mxu0 0.0
          %726 = vmatpush1.msra.mxu0 0.0
          %727 = vmatprep.subr.mxu0 0.0
          %728 = vmatpush1.msra.mxu0 0.0
          %729 = vmatprep.subr.mxu0 0.0
          %730 = vmatpush1.msra.mxu0 0.0
          %731 = vmatprep.subr.mxu0 0.0
          %732 = vmatpush1.msra.mxu0 0.0
          %733 = vmatprep.subr.mxu0 0.0
          %734 = vmatpush1.msra.mxu0 0.0
          %735 = vmatprep.subr.mxu0 0.0
          %736 = vmatpush1.msra.mxu0 0.0
          %737 = vmatprep.subr.mxu0 0.0
          %738 = vmatpush1.msra.mxu0 0.0
          %739 = vmatprep.subr.mxu0 0.0
          %740 = vmatpush1.msra.mxu0 0.0
          %741 = vmatprep.subr.mxu0 0.0
          %742 = vmatpush1.msra.mxu0 0.0
          %743 = vmatprep.subr.mxu0 0.0
          %744 = vmatpush1.msra.mxu0 0.0
          %745 = vmatprep.subr.mxu0 0.0
          %746 = vmatpush1.msra.mxu0 0.0
          %747 = vmatprep.subr.mxu0 0.0
          %748 = vmatpush1.msra.mxu0 0.0
          %749 = vmatprep.subr.mxu0 0.0
          %750 = vmatpush1.msra.mxu0 0.0
          %751 = vmatprep.subr.mxu0 0.0
          %752 = vmatpush1.msra.mxu0 0.0
          %753 = vmatprep.subr.mxu0 0.0
          %754 = vmatpush1.msra.mxu0 0.0
          %755 = vmatprep.subr.mxu0 0.0
          %756 = vmatpush1.msra.mxu0 0.0
          %757 = vmatprep.subr.mxu0 0.0
          %758 = vmatpush1.msra.mxu0 0.0
          %759 = vmatprep.subr.mxu0 0.0
          %760 = vmatpush1.msra.mxu0 0.0
          %761 = vmatprep.subr.mxu0 0.0
          %762 = vmatpush1.msra.mxu0 0.0
          %763 = vmatprep.subr.mxu0 0.0
          %764 = vmatpush1.msra.mxu0 0.0
          %765 = vmatprep.subr.mxu0 0.0
          %766 = vmatpush1.msra.mxu0 0.0
          %767 = vmatprep.subr.mxu0 0.0
          %768 = vmatpush1.msra.mxu0 0.0
          %769 = vmatprep.subr.mxu0 0.0
          %770 = vmatpush1.msra.mxu0 0.0
          %771 = vmatprep.subr.mxu0 0.0
          %772 = vmatpush1.msra.mxu0 0.0
          %773 = vmatprep.subr.mxu0 0.0
          %774 = vmatpush1.msra.mxu0 0.0
          %775 = vmatprep.subr.mxu0 0.0
          %776 = vmatpush1.msra.mxu0 0.0
          %777 = vmatprep.subr.mxu0 0.0
          %778 = vmatpush1.msra.mxu0 0.0
          %779 = vmatprep.mubr.f32.mxu0 0.0
          %780 = vmatmul.mubr.f32.gmra.mrb[0].mxu0 %v562
          %v781 = vpop.f32.mrb[0].mxu0
          %v782 = vadd.f32 0.0, %v781
          %v783 = vpop.f32.mrb[0].mxu0
          %784 = vdwg.mxu0
          %v786 = vsel %vm546, %v634, 0
          %v789 = vsel %vm546, %v707, 0
          %791 = vmatprep.subr.mxu0 0.0
          %792 = vmatpush1.xpose.msra.mxu0 %v789
          %793 = vmatprep.subr.mxu0 0.0
          %794 = vmatpush1.xpose.msra.mxu0 0.0
          %795 = vmatprep.subr.mxu0 0.0
          %796 = vmatpush1.xpose.msra.mxu0 0.0
          %797 = vmatprep.subr.mxu0 0.0
          %798 = vmatpush1.xpose.msra.mxu0 0.0
          %799 = vmatprep.subr.mxu0 0.0
          %800 = vmatpush1.xpose.msra.mxu0 0.0
          %801 = vmatprep.subr.mxu0 0.0
          %802 = vmatpush1.xpose.msra.mxu0 0.0
          %803 = vmatprep.subr.mxu0 0.0
          %804 = vmatpush1.xpose.msra.mxu0 0.0
          %805 = vmatprep.subr.mxu0 0.0
          %806 = vmatpush1.xpose.msra.mxu0 0.0
          %807 = vmatprep.subr.mxu0 0.0
          %808 = vmatpush1.xpose.msra.mxu0 0.0
          %809 = vmatprep.subr.mxu0 0.0
          %810 = vmatpush1.xpose.msra.mxu0 0.0
          %811 = vmatprep.subr.mxu0 0.0
          %812 = vmatpush1.xpose.msra.mxu0 0.0
          %813 = vmatprep.subr.mxu0 0.0
          %814 = vmatpush1.xpose.msra.mxu0 0.0
          %815 = vmatprep.subr.mxu0 0.0
          %816 = vmatpush1.xpose.msra.mxu0 0.0
          %817 = vmatprep.subr.mxu0 0.0
          %818 = vmatpush1.xpose.msra.mxu0 0.0
          %819 = vmatprep.subr.mxu0 0.0
          %820 = vmatpush1.xpose.msra.mxu0 0.0
          %821 = vmatprep.subr.mxu0 0.0
          %822 = vmatpush1.xpose.msra.mxu0 0.0
          %823 = vmatprep.subr.mxu0 0.0
          %824 = vmatpush1.xpose.msra.mxu0 0.0
          %825 = vmatprep.subr.mxu0 0.0
          %826 = vmatpush1.xpose.msra.mxu0 0.0
          %827 = vmatprep.subr.mxu0 0.0
          %828 = vmatpush1.xpose.msra.mxu0 0.0
          %829 = vmatprep.subr.mxu0 0.0
          %830 = vmatpush1.xpose.msra.mxu0 0.0
          %831 = vmatprep.subr.mxu0 0.0
          %832 = vmatpush1.xpose.msra.mxu0 0.0
          %833 = vmatprep.subr.mxu0 0.0
          %834 = vmatpush1.xpose.msra.mxu0 0.0
          %835 = vmatprep.subr.mxu0 0.0
          %836 = vmatpush1.xpose.msra.mxu0 0.0
          %837 = vmatprep.subr.mxu0 0.0
          %838 = vmatpush1.xpose.msra.mxu0 0.0
          %839 = vmatprep.subr.mxu0 0.0
          %840 = vmatpush1.xpose.msra.mxu0 0.0
          %841 = vmatprep.subr.mxu0 0.0
          %842 = vmatpush1.xpose.msra.mxu0 0.0
          %843 = vmatprep.subr.mxu0 0.0
          %844 = vmatpush1.xpose.msra.mxu0 0.0
          %845 = vmatprep.subr.mxu0 0.0
          %846 = vmatpush1.xpose.msra.mxu0 0.0
          %847 = vmatprep.subr.mxu0 0.0
          %848 = vmatpush1.xpose.msra.mxu0 0.0
          %849 = vmatprep.subr.mxu0 0.0
          %850 = vmatpush1.xpose.msra.mxu0 0.0
          %851 = vmatprep.subr.mxu0 0.0
          %852 = vmatpush1.xpose.msra.mxu0 0.0
          %853 = vmatprep.subr.mxu0 0.0
          %854 = vmatpush1.xpose.msra.mxu0 0.0
          %855 = vmatprep.mubr.f32.mxu0 0.0
          %856 = vmatmul.mubr.f32.gmra.mrb[0].mxu0 %v786
          %v857 = vpop.f32.mrb[0].mxu0
          %v858 = vadd.f32 0.0, %v857
          %v859 = vpop.f32.mrb[0].mxu0
          %860 = vdwg.mxu0
          %vm861 = vcmask 64512
          %v862 = vsel %vm861, %v858, -inf
          %863 = vmax.xlane.f32.xlu0 %v862
          %v864 = vpop.xlane.xlu0 %863
          %v865 = vsub.f32 %v858, %v864
          %v866 = vmul.f32 %v865, 1.442695
          %v867 = vpow.pop %v866
          %v868 = vsel %vm861, %v867, 0.0
          %869 = vadd.xlane.f32.xlu0 %v868
          %v870 = vpop.xlane.xlu0 %869
          %v871 = vrcp.pop %v870
          %v872 = vmul.f32 %v867, %v871
          %v874 = vsel %vm861, %v872, 0
          %876 = vmatprep.subr.mxu0 0.0
          %877 = vmatpush1.msra.mxu0 %v782
          %878 = vmatprep.subr.mxu0 0.0
          %879 = vmatpush1.msra.mxu0 0.0
          %880 = vmatprep.subr.mxu0 0.0
          %881 = vmatpush1.msra.mxu0 0.0
          %882 = vmatprep.subr.mxu0 0.0
          %883 = vmatpush1.msra.mxu0 0.0
          %884 = vmatprep.subr.mxu0 0.0
          %885 = vmatpush1.msra.mxu0 0.0
          %886 = vmatprep.subr.mxu0 0.0
          %887 = vmatpush1.msra.mxu0 0.0
          %888 = vmatprep.subr.mxu0 0.0
          %889 = vmatpush1.msra.mxu0 0.0
          %890 = vmatprep.subr.mxu0 0.0
          %891 = vmatpush1.msra.mxu0 0.0
          %892 = vmatprep.subr.mxu0 0.0
          %893 = vmatpush1.msra.mxu0 0.0
          %894 = vmatprep.subr.mxu0 0.0
          %895 = vmatpush1.msra.mxu0 0.0
          %896 = vmatprep.subr.mxu0 0.0
          %897 = vmatpush1.msra.mxu0 0.0
          %898 = vmatprep.subr.mxu0 0.0
          %899 = vmatpush1.msra.mxu0 0.0
          %900 = vmatprep.subr.mxu0 0.0
          %901 = vmatpush1.msra.mxu0 0.0
          %902 = vmatprep.subr.mxu0 0.0
          %903 = vmatpush1.msra.mxu0 0.0
          %904 = vmatprep.subr.mxu0 0.0
          %905 = vmatpush1.msra.mxu0 0.0
          %906 = vmatprep.subr.mxu0 0.0
          %907 = vmatpush1.msra.mxu0 0.0
          %908 = vmatprep.subr.mxu0 0.0
          %909 = vmatpush1.msra.mxu0 0.0
          %910 = vmatprep.subr.mxu0 0.0
          %911 = vmatpush1.msra.mxu0 0.0
          %912 = vmatprep.subr.mxu0 0.0
          %913 = vmatpush1.msra.mxu0 0.0
          %914 = vmatprep.subr.mxu0 0.0
          %915 = vmatpush1.msra.mxu0 0.0
          %916 = vmatprep.subr.mxu0 0.0
          %917 = vmatpush1.msra.mxu0 0.0
          %918 = vmatprep.subr.mxu0 0.0
          %919 = vmatpush1.msra.mxu0 0.0
          %920 = vmatprep.subr.mxu0 0.0
          %921 = vmatpush1.msra.mxu0 0.0
          %922 = vmatprep.subr.mxu0 0.0
          %923 = vmatpush1.msra.mxu0 0.0
          %924 = vmatprep.subr.mxu0 0.0
          %925 = vmatpush1.msra.mxu0 0.0
          %926 = vmatprep.subr.mxu0 0.0
          %927 = vmatpush1.msra.mxu0 0.0
          %928 = vmatprep.subr.mxu0 0.0
          %929 = vmatpush1.msra.mxu0 0.0
          %930 = vmatprep.subr.mxu0 0.0
          %931 = vmatpush1.msra.mxu0 0.0
          %932 = vmatprep.subr.mxu0 0.0
          %933 = vmatpush1.msra.mxu0 0.0
          %934 = vmatprep.subr.mxu0 0.0
          %935 = vmatpush1.msra.mxu0 0.0
          %936 = vmatprep.subr.mxu0 0.0
          %937 = vmatpush1.msra.mxu0 0.0
          %938 = vmatprep.subr.mxu0 0.0
          %939 = vmatpush1.msra.mxu0 0.0
          %940 = vmatprep.mubr.f32.mxu0 0.0
          %941 = vmatmul.mubr.f32.gmra.mrb[0].mxu0 %v874
          %v942 = vpop.f32.mrb[0].mxu0
          %v943 = vadd.f32 0.0, %v942
          %v944 = vpop.f32.mrb[0].mxu0
          %945 = vdwg.mxu0
          %946 = vst.msk [vmem:[#allocation3] sm:$0xff] %vm546, %v943
          %947 = vrot.lane.b32.xlu0 %v634, 96
          %v948 = vpop.permute.xlu0 %947
          %949 = vrot.lane.b32.xlu0 %v707, 96
          %v950 = vpop.permute.xlu0 %949
          %v951 = vsel %vm546, %v948, 0
          %v953 = vsel %vm546, %v950, 0
          %955 = vmatprep.subr.mxu0 0.0
          %956 = vmatpush1.xpose.msra.mxu0 %v953
          %957 = vmatprep.subr.mxu0 0.0
          %958 = vmatpush1.xpose.msra.mxu0 0.0
          %959 = vmatprep.subr.mxu0 0.0
          %960 = vmatpush1.xpose.msra.mxu0 0.0
          %961 = vmatprep.subr.mxu0 0.0
          %962 = vmatpush1.xpose.msra.mxu0 0.0
          %963 = vmatprep.subr.mxu0 0.0
          %964 = vmatpush1.xpose.msra.mxu0 0.0
          %965 = vmatprep.subr.mxu0 0.0
          %966 = vmatpush1.xpose.msra.mxu0 0.0
          %967 = vmatprep.subr.mxu0 0.0
          %968 = vmatpush1.xpose.msra.mxu0 0.0
          %969 = vmatprep.subr.mxu0 0.0
          %970 = vmatpush1.xpose.msra.mxu0 0.0
          %971 = vmatprep.subr.mxu0 0.0
          %972 = vmatpush1.xpose.msra.mxu0 0.0
          %973 = vmatprep.subr.mxu0 0.0
          %974 = vmatpush1.xpose.msra.mxu0 0.0
          %975 = vmatprep.subr.mxu0 0.0
          %976 = vmatpush1.xpose.msra.mxu0 0.0
          %977 = vmatprep.subr.mxu0 0.0
          %978 = vmatpush1.xpose.msra.mxu0 0.0
          %979 = vmatprep.subr.mxu0 0.0
          %980 = vmatpush1.xpose.msra.mxu0 0.0
          %981 = vmatprep.subr.mxu0 0.0
          %982 = vmatpush1.xpose.msra.mxu0 0.0
          %983 = vmatprep.subr.mxu0 0.0
          %984 = vmatpush1.xpose.msra.mxu0 0.0
          %985 = vmatprep.subr.mxu0 0.0
          %986 = vmatpush1.xpose.msra.mxu0 0.0
          %987 = vmatprep.subr.mxu0 0.0
          %988 = vmatpush1.xpose.msra.mxu0 0.0
          %989 = vmatprep.subr.mxu0 0.0
          %990 = vmatpush1.xpose.msra.mxu0 0.0
          %991 = vmatprep.subr.mxu0 0.0
          %992 = vmatpush1.xpose.msra.mxu0 0.0
          %993 = vmatprep.subr.mxu0 0.0
          %994 = vmatpush1.xpose.msra.mxu0 0.0
          %995 = vmatprep.subr.mxu0 0.0
          %996 = vmatpush1.xpose.msra.mxu0 0.0
          %997 = vmatprep.subr.mxu0 0.0
          %998 = vmatpush1.xpose.msra.mxu0 0.0
          %999 = vmatprep.subr.mxu0 0.0
          %1000 = vmatpush1.xpose.msra.mxu0 0.0
          %1001 = vmatprep.subr.mxu0 0.0
          %1002 = vmatpush1.xpose.msra.mxu0 0.0
          %1003 = vmatprep.subr.mxu0 0.0
          %1004 = vmatpush1.xpose.msra.mxu0 0.0
          %1005 = vmatprep.subr.mxu0 0.0
          %1006 = vmatpush1.xpose.msra.mxu0 0.0
          %1007 = vmatprep.subr.mxu0 0.0
          %1008 = vmatpush1.xpose.msra.mxu0 0.0
          %1009 = vmatprep.subr.mxu0 0.0
          %1010 = vmatpush1.xpose.msra.mxu0 0.0
          %1011 = vmatprep.subr.mxu0 0.0
          %1012 = vmatpush1.xpose.msra.mxu0 0.0
          %1013 = vmatprep.subr.mxu0 0.0
          %1014 = vmatpush1.xpose.msra.mxu0 0.0
          %1015 = vmatprep.subr.mxu0 0.0
          %1016 = vmatpush1.xpose.msra.mxu0 0.0
          %1017 = vmatprep.subr.mxu0 0.0
          %1018 = vmatpush1.xpose.msra.mxu0 0.0
          %1019 = vmatprep.mubr.f32.mxu0 0.0
          %1020 = vmatmul.mubr.f32.gmra.mrb[0].mxu0 %v951
          %v1021 = vpop.f32.mrb[0].mxu0
          %v1022 = vadd.f32 0.0, %v1021
          %v1023 = vpop.f32.mrb[0].mxu0
          %1024 = vdwg.mxu0
          %v1025 = vsel %vm861, %v1022, -inf
          %1026 = vmax.xlane.f32.xlu0 %v1025
          %v1027 = vpop.xlane.xlu0 %1026
          %v1028 = vsub.f32 %v1022, %v1027
          %v1029 = vmul.f32 %v1028, 1.442695
          %v1030 = vpow.pop %v1029
          %v1031 = vsel %vm861, %v1030, 0.0
          %1032 = vadd.xlane.f32.xlu0 %v1031
          %v1033 = vpop.xlane.xlu0 %1032
          %v1034 = vrcp.pop %v1033
          %v1035 = vmul.f32 %v1030, %v1034
          %1037 = vrot.lane.b32.xlu0 %v782, 96
          %v1038 = vpop.permute.xlu0 %1037
          %v1041 = vsel %vm861, %v1035, 0
          %1043 = vmatprep.subr.mxu0 0.0
          %1044 = vmatpush1.msra.mxu0 %v1038
          %1045 = vmatprep.subr.mxu0 0.0
          %1046 = vmatpush1.msra.mxu0 0.0
          %1047 = vmatprep.subr.mxu0 0.0
          %1048 = vmatpush1.msra.mxu0 0.0
          %1049 = vmatprep.subr.mxu0 0.0
          %1050 = vmatpush1.msra.mxu0 0.0
          %1051 = vmatprep.subr.mxu0 0.0
          %1052 = vmatpush1.msra.mxu0 0.0
          %1053 = vmatprep.subr.mxu0 0.0
          %1054 = vmatpush1.msra.mxu0 0.0
          %1055 = vmatprep.subr.mxu0 0.0
          %1056 = vmatpush1.msra.mxu0 0.0
          %1057 = vmatprep.subr.mxu0 0.0
          %1058 = vmatpush1.msra.mxu0 0.0
          %1059 = vmatprep.subr.mxu0 0.0
          %1060 = vmatpush1.msra.mxu0 0.0
          %1061 = vmatprep.subr.mxu0 0.0
          %1062 = vmatpush1.msra.mxu0 0.0
          %1063 = vmatprep.subr.mxu0 0.0
          %1064 = vmatpush1.msra.mxu0 0.0
          %1065 = vmatprep.subr.mxu0 0.0
          %1066 = vmatpush1.msra.mxu0 0.0
          %1067 = vmatprep.subr.mxu0 0.0
          %1068 = vmatpush1.msra.mxu0 0.0
          %1069 = vmatprep.subr.mxu0 0.0
          %1070 = vmatpush1.msra.mxu0 0.0
          %1071 = vmatprep.subr.mxu0 0.0
          %1072 = vmatpush1.msra.mxu0 0.0
          %1073 = vmatprep.subr.mxu0 0.0
          %1074 = vmatpush1.msra.mxu0 0.0
          %1075 = vmatprep.subr.mxu0 0.0
          %1076 = vmatpush1.msra.mxu0 0.0
          %1077 = vmatprep.subr.mxu0 0.0
          %1078 = vmatpush1.msra.mxu0 0.0
          %1079 = vmatprep.subr.mxu0 0.0
          %1080 = vmatpush1.msra.mxu0 0.0
          %1081 = vmatprep.subr.mxu0 0.0
          %1082 = vmatpush1.msra.mxu0 0.0
          %1083 = vmatprep.subr.mxu0 0.0
          %1084 = vmatpush1.msra.mxu0 0.0
          %1085 = vmatprep.subr.mxu0 0.0
          %1086 = vmatpush1.msra.mxu0 0.0
          %1087 = vmatprep.subr.mxu0 0.0
          %1088 = vmatpush1.msra.mxu0 0.0
          %1089 = vmatprep.subr.mxu0 0.0
          %1090 = vmatpush1.msra.mxu0 0.0
          %1091 = vmatprep.subr.mxu0 0.0
          %1092 = vmatpush1.msra.mxu0 0.0
          %1093 = vmatprep.subr.mxu0 0.0
          %1094 = vmatpush1.msra.mxu0 0.0
          %1095 = vmatprep.subr.mxu0 0.0
          %1096 = vmatpush1.msra.mxu0 0.0
          %1097 = vmatprep.subr.mxu0 0.0
          %1098 = vmatpush1.msra.mxu0 0.0
          %1099 = vmatprep.subr.mxu0 0.0
          %1100 = vmatpush1.msra.mxu0 0.0
          %1101 = vmatprep.subr.mxu0 0.0
          %1102 = vmatpush1.msra.mxu0 0.0
          %1103 = vmatprep.subr.mxu0 0.0
          %1104 = vmatpush1.msra.mxu0 0.0
          %1105 = vmatprep.subr.mxu0 0.0
          %1106 = vmatpush1.msra.mxu0 0.0
          %1107 = vmatprep.mubr.f32.mxu0 0.0
          %1108 = vmatmul.mubr.f32.gmra.mrb[0].mxu0 %v1041
          %v1109 = vpop.f32.mrb[0].mxu0
          %v1110 = vadd.f32 0.0, %v1109
          %v1111 = vpop.f32.mrb[0].mxu0
          %1112 = vdwg.mxu0
          %1114 = vrot.lane.b32.xlu0 %v1110, 32
          %v1115 = vpop.permute.xlu0 %1114
          %vm1117 = vcmask 523520
          %1118 = vst.msk [vmem:[#allocation3] sm:$0xff] %vm1117, %v1115
          %1119 = vrot.lane.b32.xlu0 %v634, 64
          %v1120 = vpop.permute.xlu0 %1119
          %1121 = vrot.lane.b32.xlu0 %v707, 64
          %v1122 = vpop.permute.xlu0 %1121
          %v1123 = vsel %vm546, %v1120, 0
          %v1125 = vsel %vm546, %v1122, 0
          %1127 = vmatprep.subr.mxu0 0.0
          %1128 = vmatpush1.xpose.msra.mxu0 %v1125
          %1129 = vmatprep.subr.mxu0 0.0
          %1130 = vmatpush1.xpose.msra.mxu0 0.0
          %1131 = vmatprep.subr.mxu0 0.0
          %1132 = vmatpush1.xpose.msra.mxu0 0.0
          %1133 = vmatprep.subr.mxu0 0.0
          %1134 = vmatpush1.xpose.msra.mxu0 0.0
          %1135 = vmatprep.subr.mxu0 0.0
          %1136 = vmatpush1.xpose.msra.mxu0 0.0
          %1137 = vmatprep.subr.mxu0 0.0
          %1138 = vmatpush1.xpose.msra.mxu0 0.0
          %1139 = vmatprep.subr.mxu0 0.0
          %1140 = vmatpush1.xpose.msra.mxu0 0.0
          %1141 = vmatprep.subr.mxu0 0.0
          %1142 = vmatpush1.xpose.msra.mxu0 0.0
          %1143 = vmatprep.subr.mxu0 0.0
          %1144 = vmatpush1.xpose.msra.mxu0 0.0
          %1145 = vmatprep.subr.mxu0 0.0
          %1146 = vmatpush1.xpose.msra.mxu0 0.0
          %1147 = vmatprep.subr.mxu0 0.0
          %1148 = vmatpush1.xpose.msra.mxu0 0.0
          %1149 = vmatprep.subr.mxu0 0.0
          %1150 = vmatpush1.xpose.msra.mxu0 0.0
          %1151 = vmatprep.subr.mxu0 0.0
          %1152 = vmatpush1.xpose.msra.mxu0 0.0
          %1153 = vmatprep.subr.mxu0 0.0
          %1154 = vmatpush1.xpose.msra.mxu0 0.0
          %1155 = vmatprep.subr.mxu0 0.0
          %1156 = vmatpush1.xpose.msra.mxu0 0.0
          %1157 = vmatprep.subr.mxu0 0.0
          %1158 = vmatpush1.xpose.msra.mxu0 0.0
          %1159 = vmatprep.subr.mxu0 0.0
          %1160 = vmatpush1.xpose.msra.mxu0 0.0
          %1161 = vmatprep.subr.mxu0 0.0
          %1162 = vmatpush1.xpose.msra.mxu0 0.0
          %1163 = vmatprep.subr.mxu0 0.0
          %1164 = vmatpush1.xpose.msra.mxu0 0.0
          %1165 = vmatprep.subr.mxu0 0.0
          %1166 = vmatpush1.xpose.msra.mxu0 0.0
          %1167 = vmatprep.subr.mxu0 0.0
          %1168 = vmatpush1.xpose.msra.mxu0 0.0
          %1169 = vmatprep.subr.mxu0 0.0
          %1170 = vmatpush1.xpose.msra.mxu0 0.0
          %1171 = vmatprep.subr.mxu0 0.0
          %1172 = vmatpush1.xpose.msra.mxu0 0.0
          %1173 = vmatprep.subr.mxu0 0.0
          %1174 = vmatpush1.xpose.msra.mxu0 0.0
          %1175 = vmatprep.subr.mxu0 0.0
          %1176 = vmatpush1.xpose.msra.mxu0 0.0
          %1177 = vmatprep.subr.mxu0 0.0
          %1178 = vmatpush1.xpose.msra.mxu0 0.0
          %1179 = vmatprep.subr.mxu0 0.0
          %1180 = vmatpush1.xpose.msra.mxu0 0.0
          %1181 = vmatprep.subr.mxu0 0.0
          %1182 = vmatpush1.xpose.msra.mxu0 0.0
          %1183 = vmatprep.subr.mxu0 0.0
          %1184 = vmatpush1.xpose.msra.mxu0 0.0
          %1185 = vmatprep.subr.mxu0 0.0
          %1186 = vmatpush1.xpose.msra.mxu0 0.0
          %1187 = vmatprep.subr.mxu0 0.0
          %1188 = vmatpush1.xpose.msra.mxu0 0.0
          %1189 = vmatprep.subr.mxu0 0.0
          %1190 = vmatpush1.xpose.msra.mxu0 0.0
          %1191 = vmatprep.mubr.f32.mxu0 0.0
          %1192 = vmatmul.mubr.f32.gmra.mrb[0].mxu0 %v1123
          %v1193 = vpop.f32.mrb[0].mxu0
          %v1194 = vadd.f32 0.0, %v1193
          %v1195 = vpop.f32.mrb[0].mxu0
          %1196 = vdwg.mxu0
          %v1197 = vsel %vm861, %v1194, -inf
          %1198 = vmax.xlane.f32.xlu0 %v1197
          %v1199 = vpop.xlane.xlu0 %1198
          %v1200 = vsub.f32 %v1194, %v1199
          %v1201 = vmul.f32 %v1200, 1.442695
          %v1202 = vpow.pop %v1201
          %v1203 = vsel %vm861, %v1202, 0.0
          %1204 = vadd.xlane.f32.xlu0 %v1203
          %v1205 = vpop.xlane.xlu0 %1204
          %v1206 = vrcp.pop %v1205
          %v1207 = vmul.f32 %v1202, %v1206
          %1208 = vrot.lane.b32.xlu0 %v782, 64
          %v1209 = vpop.permute.xlu0 %1208
          %v1212 = vsel %vm861, %v1207, 0
          %1214 = vmatprep.subr.mxu0 0.0
          %1215 = vmatpush1.msra.mxu0 %v1209
          %1216 = vmatprep.subr.mxu0 0.0
          %1217 = vmatpush1.msra.mxu0 0.0
          %1218 = vmatprep.subr.mxu0 0.0
          %1219 = vmatpush1.msra.mxu0 0.0
          %1220 = vmatprep.subr.mxu0 0.0
          %1221 = vmatpush1.msra.mxu0 0.0
          %1222 = vmatprep.subr.mxu0 0.0
          %1223 = vmatpush1.msra.mxu0 0.0
          %1224 = vmatprep.subr.mxu0 0.0
          %1225 = vmatpush1.msra.mxu0 0.0
          %1226 = vmatprep.subr.mxu0 0.0
          %1227 = vmatpush1.msra.mxu0 0.0
          %1228 = vmatprep.subr.mxu0 0.0
          %1229 = vmatpush1.msra.mxu0 0.0
          %1230 = vmatprep.subr.mxu0 0.0
          %1231 = vmatpush1.msra.mxu0 0.0
          %1232 = vmatprep.subr.mxu0 0.0
          %1233 = vmatpush1.msra.mxu0 0.0
          %1234 = vmatprep.subr.mxu0 0.0
          %1235 = vmatpush1.msra.mxu0 0.0
          %1236 = vmatprep.subr.mxu0 0.0
          %1237 = vmatpush1.msra.mxu0 0.0
          %1238 = vmatprep.subr.mxu0 0.0
          %1239 = vmatpush1.msra.mxu0 0.0
          %1240 = vmatprep.subr.mxu0 0.0
          %1241 = vmatpush1.msra.mxu0 0.0
          %1242 = vmatprep.subr.mxu0 0.0
          %1243 = vmatpush1.msra.mxu0 0.0
          %1244 = vmatprep.subr.mxu0 0.0
          %1245 = vmatpush1.msra.mxu0 0.0
          %1246 = vmatprep.subr.mxu0 0.0
          %1247 = vmatpush1.msra.mxu0 0.0
          %1248 = vmatprep.subr.mxu0 0.0
          %1249 = vmatpush1.msra.mxu0 0.0
          %1250 = vmatprep.subr.mxu0 0.0
          %1251 = vmatpush1.msra.mxu0 0.0
          %1252 = vmatprep.subr.mxu0 0.0
          %1253 = vmatpush1.msra.mxu0 0.0
          %1254 = vmatprep.subr.mxu0 0.0
          %1255 = vmatpush1.msra.mxu0 0.0
          %1256 = vmatprep.subr.mxu0 0.0
          %1257 = vmatpush1.msra.mxu0 0.0
          %1258 = vmatprep.subr.mxu0 0.0
          %1259 = vmatpush1.msra.mxu0 0.0
          %1260 = vmatprep.subr.mxu0 0.0
          %1261 = vmatpush1.msra.mxu0 0.0
          %1262 = vmatprep.subr.mxu0 0.0
          %1263 = vmatpush1.msra.mxu0 0.0
          %1264 = vmatprep.subr.mxu0 0.0
          %1265 = vmatpush1.msra.mxu0 0.0
          %1266 = vmatprep.subr.mxu0 0.0
          %1267 = vmatpush1.msra.mxu0 0.0
          %1268 = vmatprep.subr.mxu0 0.0
          %1269 = vmatpush1.msra.mxu0 0.0
          %1270 = vmatprep.subr.mxu0 0.0
          %1271 = vmatpush1.msra.mxu0 0.0
          %1272 = vmatprep.subr.mxu0 0.0
          %1273 = vmatpush1.msra.mxu0 0.0
          %1274 = vmatprep.subr.mxu0 0.0
          %1275 = vmatpush1.msra.mxu0 0.0
          %1276 = vmatprep.subr.mxu0 0.0
          %1277 = vmatpush1.msra.mxu0 0.0
          %1278 = vmatprep.mubr.f32.mxu0 0.0
          %1279 = vmatmul.mubr.f32.gmra.mrb[0].mxu0 %v1212
          %v1280 = vpop.f32.mrb[0].mxu0
          %v1281 = vadd.f32 0.0, %v1280
          %v1282 = vpop.f32.mrb[0].mxu0
          %1283 = vdwg.mxu0
          %1285 = vrot.lane.b32.xlu0 %v1281, 64
          %v1286 = vpop.permute.xlu0 %1285
          %vm1288 = vcmask 785920
          %1289 = vst.msk [vmem:[#allocation3] sm:$0xff] %vm1288, %v1286
          %1290 = vrot.lane.b32.xlu0 %v634, 32
          %v1291 = vpop.permute.xlu0 %1290
          %1292 = vrot.lane.b32.xlu0 %v707, 32
          %v1293 = vpop.permute.xlu0 %1292
          %v1294 = vsel %vm546, %v1291, 0
          %v1296 = vsel %vm546, %v1293, 0
          %1298 = vmatprep.subr.mxu0 0.0
          %1299 = vmatpush1.xpose.msra.mxu0 %v1296
          %1300 = vmatprep.subr.mxu0 0.0
          %1301 = vmatpush1.xpose.msra.mxu0 0.0
          %1302 = vmatprep.subr.mxu0 0.0
          %1303 = vmatpush1.xpose.msra.mxu0 0.0
          %1304 = vmatprep.subr.mxu0 0.0
          %1305 = vmatpush1.xpose.msra.mxu0 0.0
          %1306 = vmatprep.subr.mxu0 0.0
          %1307 = vmatpush1.xpose.msra.mxu0 0.0
          %1308 = vmatprep.subr.mxu0 0.0
          %1309 = vmatpush1.xpose.msra.mxu0 0.0
          %1310 = vmatprep.subr.mxu0 0.0
          %1311 = vmatpush1.xpose.msra.mxu0 0.0
          %1312 = vmatprep.subr.mxu0 0.0
          %1313 = vmatpush1.xpose.msra.mxu0 0.0
          %1314 = vmatprep.subr.mxu0 0.0
          %1315 = vmatpush1.xpose.msra.mxu0 0.0
          %1316 = vmatprep.subr.mxu0 0.0
          %1317 = vmatpush1.xpose.msra.mxu0 0.0
          %1318 = vmatprep.subr.mxu0 0.0
          %1319 = vmatpush1.xpose.msra.mxu0 0.0
          %1320 = vmatprep.subr.mxu0 0.0
          %1321 = vmatpush1.xpose.msra.mxu0 0.0
          %1322 = vmatprep.subr.mxu0 0.0
          %1323 = vmatpush1.xpose.msra.mxu0 0.0
          %1324 = vmatprep.subr.mxu0 0.0
          %1325 = vmatpush1.xpose.msra.mxu0 0.0
          %1326 = vmatprep.subr.mxu0 0.0
          %1327 = vmatpush1.xpose.msra.mxu0 0.0
          %1328 = vmatprep.subr.mxu0 0.0
          %1329 = vmatpush1.xpose.msra.mxu0 0.0
          %1330 = vmatprep.subr.mxu0 0.0
          %1331 = vmatpush1.xpose.msra.mxu0 0.0
          %1332 = vmatprep.subr.mxu0 0.0
          %1333 = vmatpush1.xpose.msra.mxu0 0.0
          %1334 = vmatprep.subr.mxu0 0.0
          %1335 = vmatpush1.xpose.msra.mxu0 0.0
          %1336 = vmatprep.subr.mxu0 0.0
          %1337 = vmatpush1.xpose.msra.mxu0 0.0
          %1338 = vmatprep.subr.mxu0 0.0
          %1339 = vmatpush1.xpose.msra.mxu0 0.0
          %1340 = vmatprep.subr.mxu0 0.0
          %1341 = vmatpush1.xpose.msra.mxu0 0.0
          %1342 = vmatprep.subr.mxu0 0.0
          %1343 = vmatpush1.xpose.msra.mxu0 0.0
          %1344 = vmatprep.subr.mxu0 0.0
          %1345 = vmatpush1.xpose.msra.mxu0 0.0
          %1346 = vmatprep.subr.mxu0 0.0
          %1347 = vmatpush1.xpose.msra.mxu0 0.0
          %1348 = vmatprep.subr.mxu0 0.0
          %1349 = vmatpush1.xpose.msra.mxu0 0.0
          %1350 = vmatprep.subr.mxu0 0.0
          %1351 = vmatpush1.xpose.msra.mxu0 0.0
          %1352 = vmatprep.subr.mxu0 0.0
          %1353 = vmatpush1.xpose.msra.mxu0 0.0
          %1354 = vmatprep.subr.mxu0 0.0
          %1355 = vmatpush1.xpose.msra.mxu0 0.0
          %1356 = vmatprep.subr.mxu0 0.0
          %1357 = vmatpush1.xpose.msra.mxu0 0.0
          %1358 = vmatprep.subr.mxu0 0.0
          %1359 = vmatpush1.xpose.msra.mxu0 0.0
          %1360 = vmatprep.subr.mxu0 0.0
          %1361 = vmatpush1.xpose.msra.mxu0 0.0
          %1362 = vmatprep.mubr.f32.mxu0 0.0
          %1363 = vmatmul.mubr.f32.gmra.mrb[0].mxu0 %v1294
          %v1364 = vpop.f32.mrb[0].mxu0
          %v1365 = vadd.f32 0.0, %v1364
          %v1366 = vpop.f32.mrb[0].mxu0
          %1367 = vdwg.mxu0
          %v1368 = vsel %vm861, %v1365, -inf
          %1369 = vmax.xlane.f32.xlu0 %v1368
          %v1370 = vpop.xlane.xlu0 %1369
          %v1371 = vsub.f32 %v1365, %v1370
          %v1372 = vmul.f32 %v1371, 1.442695
          %v1373 = vpow.pop %v1372
          %v1374 = vsel %vm861, %v1373, 0.0
          %1375 = vadd.xlane.f32.xlu0 %v1374
          %v1376 = vpop.xlane.xlu0 %1375
          %v1377 = vrcp.pop %v1376
          %v1378 = vmul.f32 %v1373, %v1377
          %1379 = vrot.lane.b32.xlu0 %v782, 32
          %v1380 = vpop.permute.xlu0 %1379
          %v1383 = vsel %vm861, %v1378, 0
          %1385 = vmatprep.subr.mxu0 0.0
          %1386 = vmatpush1.msra.mxu0 %v1380
          %1387 = vmatprep.subr.mxu0 0.0
          %1388 = vmatpush1.msra.mxu0 0.0
          %1389 = vmatprep.subr.mxu0 0.0
          %1390 = vmatpush1.msra.mxu0 0.0
          %1391 = vmatprep.subr.mxu0 0.0
          %1392 = vmatpush1.msra.mxu0 0.0
          %1393 = vmatprep.subr.mxu0 0.0
          %1394 = vmatpush1.msra.mxu0 0.0
          %1395 = vmatprep.subr.mxu0 0.0
          %1396 = vmatpush1.msra.mxu0 0.0
          %1397 = vmatprep.subr.mxu0 0.0
          %1398 = vmatpush1.msra.mxu0 0.0
          %1399 = vmatprep.subr.mxu0 0.0
          %1400 = vmatpush1.msra.mxu0 0.0
          %1401 = vmatprep.subr.mxu0 0.0
          %1402 = vmatpush1.msra.mxu0 0.0
          %1403 = vmatprep.subr.mxu0 0.0
          %1404 = vmatpush1.msra.mxu0 0.0
          %1405 = vmatprep.subr.mxu0 0.0
          %1406 = vmatpush1.msra.mxu0 0.0
          %1407 = vmatprep.subr.mxu0 0.0
          %1408 = vmatpush1.msra.mxu0 0.0
          %1409 = vmatprep.subr.mxu0 0.0
          %1410 = vmatpush1.msra.mxu0 0.0
          %1411 = vmatprep.subr.mxu0 0.0
          %1412 = vmatpush1.msra.mxu0 0.0
          %1413 = vmatprep.subr.mxu0 0.0
          %1414 = vmatpush1.msra.mxu0 0.0
          %1415 = vmatprep.subr.mxu0 0.0
          %1416 = vmatpush1.msra.mxu0 0.0
          %1417 = vmatprep.subr.mxu0 0.0
          %1418 = vmatpush1.msra.mxu0 0.0
          %1419 = vmatprep.subr.mxu0 0.0
          %1420 = vmatpush1.msra.mxu0 0.0
          %1421 = vmatprep.subr.mxu0 0.0
          %1422 = vmatpush1.msra.mxu0 0.0
          %1423 = vmatprep.subr.mxu0 0.0
          %1424 = vmatpush1.msra.mxu0 0.0
          %1425 = vmatprep.subr.mxu0 0.0
          %1426 = vmatpush1.msra.mxu0 0.0
          %1427 = vmatprep.subr.mxu0 0.0
          %1428 = vmatpush1.msra.mxu0 0.0
          %1429 = vmatprep.subr.mxu0 0.0
          %1430 = vmatpush1.msra.mxu0 0.0
          %1431 = vmatprep.subr.mxu0 0.0
          %1432 = vmatpush1.msra.mxu0 0.0
          %1433 = vmatprep.subr.mxu0 0.0
          %1434 = vmatpush1.msra.mxu0 0.0
          %1435 = vmatprep.subr.mxu0 0.0
          %1436 = vmatpush1.msra.mxu0 0.0
          %1437 = vmatprep.subr.mxu0 0.0
          %1438 = vmatpush1.msra.mxu0 0.0
          %1439 = vmatprep.subr.mxu0 0.0
          %1440 = vmatpush1.msra.mxu0 0.0
          %1441 = vmatprep.subr.mxu0 0.0
          %1442 = vmatpush1.msra.mxu0 0.0
          %1443 = vmatprep.subr.mxu0 0.0
          %1444 = vmatpush1.msra.mxu0 0.0
          %1445 = vmatprep.subr.mxu0 0.0
          %1446 = vmatpush1.msra.mxu0 0.0
          %1447 = vmatprep.subr.mxu0 0.0
          %1448 = vmatpush1.msra.mxu0 0.0
          %1449 = vmatprep.mubr.f32.mxu0 0.0
          %1450 = vmatmul.mubr.f32.gmra.mrb[0].mxu0 %v1383
          %v1451 = vpop.f32.mrb[0].mxu0
          %v1452 = vadd.f32 0.0, %v1451
          %v1453 = vpop.f32.mrb[0].mxu0
          %1454 = vdwg.mxu0
          %1456 = vrot.lane.b32.xlu0 %v1452, 96
          %v1457 = vpop.permute.xlu0 %1456
          %vm1459 = vcmask 1048320
          %1460 = vst.msk [vmem:[#allocation3] sm:$0xff] %vm1459, %v1457
          %v1461 = vld [vmem:[#allocation3] sm:$0xff]
          %s1462 = smul.u32 %s549, 128
          %s1463 = scalar_lea.vmem %s5, %s1462
          %v1464 = vld [vmem:[%s1463] sm:$0xff]
          %v1465 = vld [vmem:[%s1463 + $0x8] sm:$0xff]
          %v1466 = vld [vmem:[%s1463 + $0x10] sm:$0xff]
          %v1467 = vld [vmem:[%s1463 + $0x18] sm:$0xff]
          %v1468 = vld [vmem:[%s1463 + $0x20] sm:$0xff]
          %v1469 = vld [vmem:[%s1463 + $0x28] sm:$0xff]
          %v1470 = vld [vmem:[%s1463 + $0x30] sm:$0xff]
          %v1471 = vld [vmem:[%s1463 + $0x38] sm:$0xff]
          %v1472 = vld [vmem:[%s1463 + $0x40] sm:$0xff]
          %v1473 = vld [vmem:[%s1463 + $0x48] sm:$0xff]
          %v1474 = vld [vmem:[%s1463 + $0x50] sm:$0xff]
          %v1475 = vld [vmem:[%s1463 + $0x58] sm:$0xff]
          %v1476 = vld [vmem:[%s1463 + $0x60] sm:$0xff]
          %v1477 = vld [vmem:[%s1463 + $0x68] sm:$0xff]
          %v1478 = vld [vmem:[%s1463 + $0x70] sm:$0xff]
          %v1479 = vld [vmem:[%s1463 + $0x78] sm:$0xff]
          %s1480 = scalar_lea.vmem %s6, %s549
          %v1481 = vld [vmem:[%s1480] sm:$0x1]
          %v1483 = vlaneseq
          %v1484 = vshrl.u32 %v1483, 7
          %v1485 = vsub.s32 0, %v1484
          %v1486 = vrot.slane %v1481, %v1485
          %1488 = vmatprep.subr.mxu0 0.0
          %1489 = vmatpush1.msra.mxu0 %v1464
          %1490 = vmatprep.subr.mxu0 0.0
          %1491 = vmatpush1.msra.mxu0 %v1465
          %1492 = vmatprep.subr.mxu0 0.0
          %1493 = vmatpush1.msra.mxu0 %v1466
          %1494 = vmatprep.subr.mxu0 0.0
          %1495 = vmatpush1.msra.mxu0 %v1467
          %1496 = vmatprep.subr.mxu0 0.0
          %1497 = vmatpush1.msra.mxu0 %v1468
          %1498 = vmatprep.subr.mxu0 0.0
          %1499 = vmatpush1.msra.mxu0 %v1469
          %1500 = vmatprep.subr.mxu0 0.0
          %1501 = vmatpush1.msra.mxu0 %v1470
          %1502 = vmatprep.subr.mxu0 0.0
          %1503 = vmatpush1.msra.mxu0 %v1471
          %1504 = vmatprep.subr.mxu0 0.0
          %1505 = vmatpush1.msra.mxu0 %v1472
          %1506 = vmatprep.subr.mxu0 0.0
          %1507 = vmatpush1.msra.mxu0 %v1473
          %1508 = vmatprep.subr.mxu0 0.0
          %1509 = vmatpush1.msra.mxu0 %v1474
          %1510 = vmatprep.subr.mxu0 0.0
          %1511 = vmatpush1.msra.mxu0 %v1475
          %1512 = vmatprep.subr.mxu0 0.0
          %1513 = vmatpush1.msra.mxu0 %v1476
          %1514 = vmatprep.subr.mxu0 0.0
          %1515 = vmatpush1.msra.mxu0 %v1477
          %1516 = vmatprep.subr.mxu0 0.0
          %1517 = vmatpush1.msra.mxu0 %v1478
          %1518 = vmatprep.subr.mxu0 0.0
          %1519 = vmatpush1.msra.mxu0 %v1479
          %1520 = vmatprep.subr.mxu0 0.0
          %1521 = vmatpush1.msra.mxu0 0.0
          %1522 = vmatprep.subr.mxu0 0.0
          %1523 = vmatpush1.msra.mxu0 0.0
          %1524 = vmatprep.subr.mxu0 0.0
          %1525 = vmatpush1.msra.mxu0 0.0
          %1526 = vmatprep.subr.mxu0 0.0
          %1527 = vmatpush1.msra.mxu0 0.0
          %1528 = vmatprep.subr.mxu0 0.0
          %1529 = vmatpush1.msra.mxu0 0.0
          %1530 = vmatprep.subr.mxu0 0.0
          %1531 = vmatpush1.msra.mxu0 0.0
          %1532 = vmatprep.subr.mxu0 0.0
          %1533 = vmatpush1.msra.mxu0 0.0
          %1534 = vmatprep.subr.mxu0 0.0
          %1535 = vmatpush1.msra.mxu0 0.0
          %1536 = vmatprep.subr.mxu0 0.0
          %1537 = vmatpush1.msra.mxu0 0.0
          %1538 = vmatprep.subr.mxu0 0.0
          %1539 = vmatpush1.msra.mxu0 0.0
          %1540 = vmatprep.subr.mxu0 0.0
          %1541 = vmatpush1.msra.mxu0 0.0
          %1542 = vmatprep.subr.mxu0 0.0
          %1543 = vmatpush1.msra.mxu0 0.0
          %1544 = vmatprep.subr.mxu0 0.0
          %1545 = vmatpush1.msra.mxu0 0.0
          %1546 = vmatprep.subr.mxu0 0.0
          %1547 = vmatpush1.msra.mxu0 0.0
          %1548 = vmatprep.subr.mxu0 0.0
          %1549 = vmatpush1.msra.mxu0 0.0
          %1550 = vmatprep.subr.mxu0 0.0
          %1551 = vmatpush1.msra.mxu0 0.0
          %1552 = vmatprep.mubr.f32.mxu0 0.0
          %1553 = vmatmul.mubr.f32.gmra.mrb[0].mxu0 %v1461
          %v1554 = vpop.f32.mrb[0].mxu0
          %v1555 = vadd.f32 %v1486, %v1554
          %v1556 = vpop.f32.mrb[0].mxu0
          %1557 = vdwg.mxu0
          %v1558 = vadd.f32 %v1555, %v554
          %v1559 = vsel %vm546, %v1558, 0.0
          %1560 = vadd.xlane.f32.xlu0 %v1559
          %v1561 = vpop.xlane.xlu0 %1560
          %v1562 = vrcp.pop 32.0
          %v1563 = vmul.f32 %v1561, %v1562
          %v1564 = vsub.f32 %v1558, %v1563
          %v1565 = vmul.f32 %v1564, %v1564
          %v1566 = vsel %vm546, %v1565, 0.0
          %1567 = vadd.xlane.f32.xlu0 %v1566
          %v1568 = vpop.xlane.xlu0 %1567
          %v1569 = vmul.f32 %v1568, %v1562
          %v1570 = vadd.f32 %v1569, 1e-05
          %v1571 = vrsqrt.pop %v1570
          %v1572 = vmul.f32 %v1564, %v1571
          %s1573 = scalar_lea.vmem %s7, %s549
          %v1574 = vld [vmem:[%s1573] sm:$0x1]
          %v1576 = vlaneseq
          %v1577 = vshrl.u32 %v1576, 7
          %v1578 = vsub.s32 0, %v1577
          %v1579 = vrot.slane %v1574, %v1578
          %v1581 = vmul.f32 %v1572, %v1579
          %s1582 = scalar_lea.vmem %s8, %s549
          %v1583 = vld [vmem:[%s1582] sm:$0x1]
          %v1585 = vlaneseq
          %v1586 = vshrl.u32 %v1585, 7
          %v1587 = vsub.s32 0, %v1586
          %v1588 = vrot.slane %v1583, %v1587
          %v1590 = vadd.f32 %v1581, %v1588
          %s1591 = scalar_lea.vmem %s9, %s555
          %v1592 = vld [vmem:[%s1591] sm:$0xff]
          %v1593 = vld [vmem:[%s1591 + $0x8] sm:$0xff]
          %v1594 = vld [vmem:[%s1591 + $0x10] sm:$0xff]
          %v1595 = vld [vmem:[%s1591 + $0x18] sm:$0xff]
          %s1596 = scalar_lea.vmem %s10, %s549
          %v1597 = vld [vmem:[%s1596] sm:$0x1]
          %v1599 = vlaneseq
          %v1600 = vshrl.u32 %v1599, 7
          %v1601 = vsub.s32 0, %v1600
          %v1602 = vrot.slane %v1597, %v1601
          %v1605 = vsel %vm546, %v1590, 0
          %1607 = vmatprep.subr.mxu0 0.0
          %1608 = vmatpush1.msra.mxu0 %v1592
          %1609 = vmatprep.subr.mxu0 0.0
          %1610 = vmatpush1.msra.mxu0 %v1593
          %1611 = vmatprep.subr.mxu0 0.0
          %1612 = vmatpush1.msra.mxu0 %v1594
          %1613 = vmatprep.subr.mxu0 0.0
          %1614 = vmatpush1.msra.mxu0 %v1595
          %1615 = vmatprep.subr.mxu0 0.0
          %1616 = vmatpush1.msra.mxu0 0.0
          %1617 = vmatprep.subr.mxu0 0.0
          %1618 = vmatpush1.msra.mxu0 0.0
          %1619 = vmatprep.subr.mxu0 0.0
          %1620 = vmatpush1.msra.mxu0 0.0
          %1621 = vmatprep.subr.mxu0 0.0
          %1622 = vmatpush1.msra.mxu0 0.0
          %1623 = vmatprep.subr.mxu0 0.0
          %1624 = vmatpush1.msra.mxu0 0.0
          %1625 = vmatprep.subr.mxu0 0.0
          %1626 = vmatpush1.msra.mxu0 0.0
          %1627 = vmatprep.subr.mxu0 0.0
          %1628 = vmatpush1.msra.mxu0 0.0
          %1629 = vmatprep.subr.mxu0 0.0
          %1630 = vmatpush1.msra.mxu0 0.0
          %1631 = vmatprep.subr.mxu0 0.0
          %1632 = vmatpush1.msra.mxu0 0.0
          %1633 = vmatprep.subr.mxu0 0.0
          %1634 = vmatpush1.msra.mxu0 0.0
          %1635 = vmatprep.subr.mxu0 0.0
          %1636 = vmatpush1.msra.mxu0 0.0
          %1637 = vmatprep.subr.mxu0 0.0
          %1638 = vmatpush1.msra.mxu0 0.0
          %1639 = vmatprep.subr.mxu0 0.0
          %1640 = vmatpush1.msra.mxu0 0.0
          %1641 = vmatprep.subr.mxu0 0.0
          %1642 = vmatpush1.msra.mxu0 0.0
          %1643 = vmatprep.subr.mxu0 0.0
          %1644 = vmatpush1.msra.mxu0 0.0
          %1645 = vmatprep.subr.mxu0 0.0
          %1646 = vmatpush1.msra.mxu0 0.0
          %1647 = vmatprep.subr.mxu0 0.0
          %1648 = vmatpush1.msra.mxu0 0.0
          %1649 = vmatprep.subr.mxu0 0.0
          %1650 = vmatpush1.msra.mxu0 0.0
          %1651 = vmatprep.subr.mxu0 0.0
          %1652 = vmatpush1.msra.mxu0 0.0
          %1653 = vmatprep.subr.mxu0 0.0
          %1654 = vmatpush1.msra.mxu0 0.0
          %1655 = vmatprep.subr.mxu0 0.0
          %1656 = vmatpush1.msra.mxu0 0.0
          %1657 = vmatprep.subr.mxu0 0.0
          %1658 = vmatpush1.msra.mxu0 0.0
          %1659 = vmatprep.subr.mxu0 0.0
          %1660 = vmatpush1.msra.mxu0 0.0
          %1661 = vmatprep.subr.mxu0 0.0
          %1662 = vmatpush1.msra.mxu0 0.0
          %1663 = vmatprep.subr.mxu0 0.0
          %1664 = vmatpush1.msra.mxu0 0.0
          %1665 = vmatprep.subr.mxu0 0.0
          %1666 = vmatpush1.msra.mxu0 0.0
          %1667 = vmatprep.subr.mxu0 0.0
          %1668 = vmatpush1.msra.mxu0 0.0
          %1669 = vmatprep.subr.mxu0 0.0
          %1670 = vmatpush1.msra.mxu0 0.0
          %1671 = vmatprep.mubr.f32.mxu0 0.0
          %1672 = vmatmul.mubr.f32.gmra.mrb[0].mxu0 %v1605
          %v1673 = vpop.f32.mrb[0].mxu0
          %v1674 = vadd.f32 %v1602, %v1673
          %v1675 = vpop.f32.mrb[0].mxu0
          %1676 = vdwg.mxu0
          %v1677 = vmax.f32 %v1674, 0.0
          %s1678 = scalar_lea.vmem %s11, %s1462
          %v1679 = vld [vmem:[%s1678] sm:$0xff]
          %v1680 = vld [vmem:[%s1678 + $0x8] sm:$0xff]
          %v1681 = vld [vmem:[%s1678 + $0x10] sm:$0xff]
          %v1682 = vld [vmem:[%s1678 + $0x18] sm:$0xff]
          %v1683 = vld [vmem:[%s1678 + $0x20] sm:$0xff]
          %v1684 = vld [vmem:[%s1678 + $0x28] sm:$0xff]
          %v1685 = vld [vmem:[%s1678 + $0x30] sm:$0xff]
          %v1686 = vld [vmem:[%s1678 + $0x38] sm:$0xff]
          %v1687 = vld [vmem:[%s1678 + $0x40] sm:$0xff]
          %v1688 = vld [vmem:[%s1678 + $0x48] sm:$0xff]
          %v1689 = vld [vmem:[%s1678 + $0x50] sm:$0xff]
          %v1690 = vld [vmem:[%s1678 + $0x58] sm:$0xff]
          %v1691 = vld [vmem:[%s1678 + $0x60] sm:$0xff]
          %v1692 = vld [vmem:[%s1678 + $0x68] sm:$0xff]
          %v1693 = vld [vmem:[%s1678 + $0x70] sm:$0xff]
          %v1694 = vld [vmem:[%s1678 + $0x78] sm:$0xff]
          %s1695 = scalar_lea.vmem %s12, %s549
          %v1696 = vld [vmem:[%s1695] sm:$0x1]
          %v1698 = vlaneseq
          %v1699 = vshrl.u32 %v1698, 7
          %v1700 = vsub.s32 0, %v1699
          %v1701 = vrot.slane %v1696, %v1700
          %1703 = vmatprep.subr.mxu0 0.0
          %1704 = vmatpush1.msra.mxu0 %v1679
          %1705 = vmatprep.subr.mxu0 0.0
          %1706 = vmatpush1.msra.mxu0 %v1680
          %1707 = vmatprep.subr.mxu0 0.0
          %1708 = vmatpush1.msra.mxu0 %v1681
          %1709 = vmatprep.subr.mxu0 0.0
          %1710 = vmatpush1.msra.mxu0 %v1682
          %1711 = vmatprep.subr.mxu0 0.0
          %1712 = vmatpush1.msra.mxu0 %v1683
          %1713 = vmatprep.subr.mxu0 0.0
          %1714 = vmatpush1.msra.mxu0 %v1684
          %1715 = vmatprep.subr.mxu0 0.0
          %1716 = vmatpush1.msra.mxu0 %v1685
          %1717 = vmatprep.subr.mxu0 0.0
          %1718 = vmatpush1.msra.mxu0 %v1686
          %1719 = vmatprep.subr.mxu0 0.0
          %1720 = vmatpush1.msra.mxu0 %v1687
          %1721 = vmatprep.subr.mxu0 0.0
          %1722 = vmatpush1.msra.mxu0 %v1688
          %1723 = vmatprep.subr.mxu0 0.0
          %1724 = vmatpush1.msra.mxu0 %v1689
          %1725 = vmatprep.subr.mxu0 0.0
          %1726 = vmatpush1.msra.mxu0 %v1690
          %1727 = vmatprep.subr.mxu0 0.0
          %1728 = vmatpush1.msra.mxu0 %v1691
          %1729 = vmatprep.subr.mxu0 0.0
          %1730 = vmatpush1.msra.mxu0 %v1692
          %1731 = vmatprep.subr.mxu0 0.0
          %1732 = vmatpush1.msra.mxu0 %v1693
          %1733 = vmatprep.subr.mxu0 0.0
          %1734 = vmatpush1.msra.mxu0 %v1694
          %1735 = vmatprep.subr.mxu0 0.0
          %1736 = vmatpush1.msra.mxu0 0.0
          %1737 = vmatprep.subr.mxu0 0.0
          %1738 = vmatpush1.msra.mxu0 0.0
          %1739 = vmatprep.subr.mxu0 0.0
          %1740 = vmatpush1.msra.mxu0 0.0
          %1741 = vmatprep.subr.mxu0 0.0
          %1742 = vmatpush1.msra.mxu0 0.0
          %1743 = vmatprep.subr.mxu0 0.0
          %1744 = vmatpush1.msra.mxu0 0.0
          %1745 = vmatprep.subr.mxu0 0.0
          %1746 = vmatpush1.msra.mxu0 0.0
          %1747 = vmatprep.subr.mxu0 0.0
          %1748 = vmatpush1.msra.mxu0 0.0
          %1749 = vmatprep.subr.mxu0 0.0
          %1750 = vmatpush1.msra.mxu0 0.0
          %1751 = vmatprep.subr.mxu0 0.0
          %1752 = vmatpush1.msra.mxu0 0.0
          %1753 = vmatprep.subr.mxu0 0.0
          %1754 = vmatpush1.msra.mxu0 0.0
          %1755 = vmatprep.subr.mxu0 0.0
          %1756 = vmatpush1.msra.mxu0 0.0
          %1757 = vmatprep.subr.mxu0 0.0
          %1758 = vmatpush1.msra.mxu0 0.0
          %1759 = vmatprep.subr.mxu0 0.0
          %1760 = vmatpush1.msra.mxu0 0.0
          %1761 = vmatprep.subr.mxu0 0.0
          %1762 = vmatpush1.msra.mxu0 0.0
          %1763 = vmatprep.subr.mxu0 0.0
          %1764 = vmatpush1.msra.mxu0 0.0
          %1765 = vmatprep.subr.mxu0 0.0
          %1766 = vmatpush1.msra.mxu0 0.0
          %1767 = vmatprep.mubr.f32.mxu0 0.0
          %1768 = vmatmul.mubr.f32.gmra.mrb[0].mxu0 %v1677
          %v1769 = vpop.f32.mrb[0].mxu0
          %v1770 = vadd.f32 %v1701, %v1769
          %v1771 = vpop.f32.mrb[0].mxu0
          %1772 = vdwg.mxu0
          %v1773 = vadd.f32 %v1770, %v1590
          %v1774 = vsel %vm546, %v1773, 0.0
          %1775 = vadd.xlane.f32.xlu0 %v1774
          %v1776 = vpop.xlane.xlu0 %1775
          %v1777 = vmul.f32 %v1776, %v1562
          %v1778 = vsub.f32 %v1773, %v1777
          %v1779 = vmul.f32 %v1778, %v1778
          %v1780 = vsel %vm546, %v1779, 0.0
          %1781 = vadd.xlane.f32.xlu0 %v1780
          %v1782 = vpop.xlane.xlu0 %1781
          %v1783 = vmul.f32 %v1782, %v1562
          %v1784 = vadd.f32 %v1783, 1e-05
          %v1785 = vrsqrt.pop %v1784
          %v1786 = vmul.f32 %v1778, %v1785
          %s1787 = scalar_lea.vmem %s13, %s549
          %v1788 = vld [vmem:[%s1787] sm:$0x1]
          %v1790 = vlaneseq
          %v1791 = vshrl.u32 %v1790, 7
          %v1792 = vsub.s32 0, %v1791
          %v1793 = vrot.slane %v1788, %v1792
          %v1795 = vmul.f32 %v1786, %v1793
          %s1796 = scalar_lea.vmem %s14, %s549
          %v1797 = vld [vmem:[%s1796] sm:$0x1]
          %v1799 = vlaneseq
          %v1800 = vshrl.u32 %v1799, 7
          %v1801 = vsub.s32 0, %v1800
          %v1802 = vrot.slane %v1797, %v1801
          %v1804 = vadd.f32 %v1795, %v1802
          %1805 = vst.msk [vmem:[#allocation2] sm:$0xff] %vm546, %v1804
        $region93: #{tpu_custom_call.1} parent=87 // loop_footer
          %s553 = sadd.s32 1, %s549
        $region94: #{tpu_custom_call.1} parent=87 // loop_footer_branch
          %548 = sbr.rel target = $region90
        $region95: #{tpu_custom_call.1} parent=87 // loop_exit
          _
        %v1806 = vld [vmem:[#allocation2] sm:$0xff]
        %v1807 = vsel %vm546, %v1806, -inf
        %v1808 = vrot.slane %v1807, 4
        %v1809 = vmax.f32 %v1807, %v1808
        %v1810 = vrot.slane %v1809, 2
        %v1811 = vmax.f32 %v1809, %v1810
        %v1812 = vrot.slane %v1811, 1
        %v1813 = vmax.f32 %v1811, %v1812
        %v1814 = vld [vmem:[%s15] sm:$0xff]
        %v1815 = vld [vmem:[%s15 + $0x8] sm:$0xff]
        %v1816 = vld [vmem:[%s15 + $0x10] sm:$0xff]
        %v1817 = vld [vmem:[%s15 + $0x18] sm:$0xff]
        %v1818 = vld [vmem:[%s16] sm:$0x1]
        %v1820 = vsel %vm546, %v1813, 0
        %1822 = vmatprep.subr.mxu0 0.0
        %1823 = vmatpush1.msra.mxu0 %v1814
        %1824 = vmatprep.subr.mxu0 0.0
        %1825 = vmatpush1.msra.mxu0 %v1815
        %1826 = vmatprep.subr.mxu0 0.0
        %1827 = vmatpush1.msra.mxu0 %v1816
        %1828 = vmatprep.subr.mxu0 0.0
        %1829 = vmatpush1.msra.mxu0 %v1817
        %1830 = vmatprep.subr.mxu0 0.0
        %1831 = vmatpush1.msra.mxu0 0.0
        %1832 = vmatprep.subr.mxu0 0.0
        %1833 = vmatpush1.msra.mxu0 0.0
        %1834 = vmatprep.subr.mxu0 0.0
        %1835 = vmatpush1.msra.mxu0 0.0
        %1836 = vmatprep.subr.mxu0 0.0
        %1837 = vmatpush1.msra.mxu0 0.0
        %1838 = vmatprep.subr.mxu0 0.0
        %1839 = vmatpush1.msra.mxu0 0.0
        %1840 = vmatprep.subr.mxu0 0.0
        %1841 = vmatpush1.msra.mxu0 0.0
        %1842 = vmatprep.subr.mxu0 0.0
        %1843 = vmatpush1.msra.mxu0 0.0
        %1844 = vmatprep.subr.mxu0 0.0
        %1845 = vmatpush1.msra.mxu0 0.0
        %1846 = vmatprep.subr.mxu0 0.0
        %1847 = vmatpush1.msra.mxu0 0.0
        %1848 = vmatprep.subr.mxu0 0.0
        %1849 = vmatpush1.msra.mxu0 0.0
        %1850 = vmatprep.subr.mxu0 0.0
        %1851 = vmatpush1.msra.mxu0 0.0
        %1852 = vmatprep.subr.mxu0 0.0
        %1853 = vmatpush1.msra.mxu0 0.0
        %1854 = vmatprep.subr.mxu0 0.0
        %1855 = vmatpush1.msra.mxu0 0.0
        %1856 = vmatprep.subr.mxu0 0.0
        %1857 = vmatpush1.msra.mxu0 0.0
        %1858 = vmatprep.subr.mxu0 0.0
        %1859 = vmatpush1.msra.mxu0 0.0
        %1860 = vmatprep.subr.mxu0 0.0
        %1861 = vmatpush1.msra.mxu0 0.0
        %1862 = vmatprep.subr.mxu0 0.0
        %1863 = vmatpush1.msra.mxu0 0.0
        %1864 = vmatprep.subr.mxu0 0.0
        %1865 = vmatpush1.msra.mxu0 0.0
        %1866 = vmatprep.subr.mxu0 0.0
        %1867 = vmatpush1.msra.mxu0 0.0
        %1868 = vmatprep.subr.mxu0 0.0
        %1869 = vmatpush1.msra.mxu0 0.0
        %1870 = vmatprep.subr.mxu0 0.0
        %1871 = vmatpush1.msra.mxu0 0.0
        %1872 = vmatprep.subr.mxu0 0.0
        %1873 = vmatpush1.msra.mxu0 0.0
        %1874 = vmatprep.subr.mxu0 0.0
        %1875 = vmatpush1.msra.mxu0 0.0
        %1876 = vmatprep.subr.mxu0 0.0
        %1877 = vmatpush1.msra.mxu0 0.0
        %1878 = vmatprep.subr.mxu0 0.0
        %1879 = vmatpush1.msra.mxu0 0.0
        %1880 = vmatprep.subr.mxu0 0.0
        %1881 = vmatpush1.msra.mxu0 0.0
        %1882 = vmatprep.subr.mxu0 0.0
        %1883 = vmatpush1.msra.mxu0 0.0
        %1884 = vmatprep.subr.mxu0 0.0
        %1885 = vmatpush1.msra.mxu0 0.0
        %1886 = vmatprep.mubr.f32.mxu0 0.0
        %1887 = vmatmul.mubr.f32.gmra.mrb[0].mxu0 %v1820
        %v1888 = vpop.f32.mrb[0].mxu0
        %v1889 = vadd.f32 %v1818, %v1888
        %v1890 = vpop.f32.mrb[0].mxu0
        %1891 = vdwg.mxu0
        %1892 = vst [vmem:[%s538] sm:$0x1] %v1889
        %s1893 = sand.u32 %s401, 1
        %s1894 = scalar_lea.sflag [#allocation5], %s1893
        %s1895 = sand.u32 %s401, 1
        %s1896 = scalar_lea.vmem [#allocation4], %s1895
        // Predicated region
        $region96: #{tpu_custom_call.1} parent=87 // pred_check
          %p1897 = pneg %p411
        $region97: #{tpu_custom_call.1} parent=87 // pred_check_branch
          %1899 = sbr.rel (%p1897) target = $region99
        $region98: #{tpu_custom_call.1} parent=87 // pred_region
          %s1901 = ssub.s32 16, 16
          %1902 = vsyncadd %s1894, %s1901
          %s1903 = smul.addr %s31, 16
          %s1904 = scalar_lea.hbm %s17, %s1903
          %s1906 = sshll.u32 %s1896, 4
          %s1907 = int_to_ptr.vmem [resolvable:$true] %s1906
          %1909 = dma.vmem_to_hbm [thread:$0]  %s1907, 16, %s1904, %s1894
        $region99: #{tpu_custom_call.1} parent=87 // pred_fallthru
          _
      $region88: #{tpu_custom_call.1} parent=5 // pred_fallthru
        _
      %p1910 = scmp.le.s32.totalorder 2, %s26
      // Predicated region
      $region100: #{tpu_custom_call.1} parent=5 // pred_check
        %p1911 = pneg %p1910
      $region101: #{tpu_custom_call.1} parent=5 // pred_check_branch
        %1913 = sbr.rel (%p1911) target = $region103
      $region102: #{tpu_custom_call.1} parent=5 // pred_region
        %s1914 = ssub.s32 %s26, 2
        // Predicated region
        $region104: #{tpu_custom_call.1} parent=102 // pred_check
          %p1915 = pneg %p417
        $region105: #{tpu_custom_call.1} parent=102 // pred_check_branch
          %1917 = sbr.rel (%p1915) target = $region107
        $region106: #{tpu_custom_call.1} parent=102 // pred_region
          %s1918 = sand.u32 %s402, 1
          %s1919 = scalar_lea.sflag [#allocation5], %s1918
          %s1920 = sand.u32 %s402, 1
          %s1921 = scalar_lea.vmem [#allocation4], %s1920
          %1922 = dma.done %s1919, 16
        $region107: #{tpu_custom_call.1} parent=102 // pred_fallthru
          _
      $region103: #{tpu_custom_call.1} parent=5 // pred_fallthru
        _
    $region6: #{tpu_custom_call.1} parent=1 // loop_footer
      %s30 = sadd.s32 1, %s26
    $region7: #{tpu_custom_call.1} parent=1 // loop_footer_branch
      %25 = sbr.rel target = $region3
    $region8: #{tpu_custom_call.1} parent=1 // loop_exit
      _
    %1923 = vsyncpa [#allocation5], 1
    %s1924 = scalar_lea.sflag [#allocation5], 1
    %1925 = vsyncpa %s1924, 1

</llo_original>
